<compile_context>
chip_gen: v5e
topology: v5e:2x2
jax: 0.10.0
libtpu: 0.0.40
codegen_flags: <defaults>
</compile_context>

<pallas_src>
import jax
import jax.numpy as jnp
from jax import lax
from jax.experimental import pallas as pl
from jax.experimental.pallas import tpu as pltpu


def control_unit_kernel(step_ref,                          # scalar prefetch (SMEM)
                        q_ref, ctrl_ref, ctx_ref,          # activations
                        w_pa_ref, b_pa_ref,                # position_aware[step]
                        w_cq_c_ref, w_cq_p_ref, b_cq_ref,  # control_question
                        w_attn_ref,                        # attn Linear(dim, 1) weight
                        next_ctrl_ref, attn_ref):          # outputs
    del step_ref  # consumed by the BlockSpec index_maps (selects w_pa/b_pa[step])

    ctx = ctx_ref[...]                 # [TB, S, D], native dtype (bf16 or f32)
    ctx_dtype = ctx.dtype
    q = q_ref[...]                     # [TB, D]
    ctrl = ctrl_ref[...]               # [TB, D]

    # position_aware = self.position_aware[step](question)   (MXU, f32 accum)
    pa = jnp.dot(q, w_pa_ref[0], preferred_element_type=jnp.float32) + b_pa_ref[0]

    # control_question = self.control_question(cat([control, position_aware], 1))
    # (concat + [2D,D] matmul decomposed into two MXU dots on the split weight)
    cq = (jnp.dot(ctrl, w_cq_c_ref[...], preferred_element_type=jnp.float32)
          + jnp.dot(pa.astype(w_cq_p_ref.dtype), w_cq_p_ref[...],
                    preferred_element_type=jnp.float32)
          + b_cq_ref[...])             # [TB, D] f32

    # Fold the Linear(dim, 1) weight into cq once: (cq*ctx) @ w == ctx . (cq*w).
    v = cq * w_attn_ref[...]           # [TB, D] f32

    # attn_weight = self.attn(control_question * context)  -> batched [TB, S]:
    # broadcast-multiply over D (lanes) + f32 lane reduce.  (b_attn dropped:
    # softmax is shift-invariant and the raw logits are never returned.)
    logits = jnp.sum(ctx.astype(jnp.float32) * v[:, None, :], axis=-1)   # [TB, S]

    # Numerically-stable softmax over the sequence (last / lane) axis.
    m = jnp.max(logits, axis=-1, keepdims=True)                          # [TB, 1]
    e = jnp.exp(logits - m)                                              # [TB, S]
    l = jnp.sum(e, axis=-1, keepdims=True)                               # [TB, 1]
    attn = e * pl.reciprocal(l, approx=True)                             # [TB, S]
    attn_ref[...] = attn.astype(attn_ref.dtype)          # one lane-dense store

    # next_control = (attn * context).sum(1): batched MXU contraction over S.
    nxt = jnp.einsum('bqs,bsd->bqd',
                     attn.astype(ctx_dtype)[:, None, :], ctx,
                     preferred_element_type=jnp.float32)                 # [TB, 1, D]
    next_ctrl_ref[...] = nxt[:, 0, :].astype(next_ctrl_ref.dtype)


def _vmem_capacity_bytes():
    """Physical VMEM of the local chip, with a conservative (v7x) fallback."""
    try:
        info = pltpu.get_tpu_info()
        cap = getattr(info, "vmem_capacity_bytes", None)
        if cap:
            return int(cap)
    except Exception:
        pass
    return 64 * 1024 * 1024


def _pick_batch_tile(B, S, D, ctx_isz, act_isz, w_isz, sublane, vmem_limit):
    """Largest sublane-aligned divisor of B whose working set fits the budget,
    capped at B//2 so the grid has >=2 steps (pipelining / megacore)."""
    if B % sublane != 0:
        return B                                   # un-tileable batch: one step
    # Fixed (batch-independent) blocks: the DxD / biased weights, x2 buffers.
    fixed = 2 * (3 * D * D + 4 * D) * w_isz
    # Per-batch-row cost: context tile + q/ctrl/next_control + attn row, all
    # double-buffered, plus an f32 epilogue-temp headroom of one context row.
    per_row = (2 * (S * D * ctx_isz + 3 * D * act_isz + S * 4)
               + S * D * 4)
    budget = vmem_limit - fixed - (4 << 20)        # slack for compiler scratch
    max_rows = max(sublane, budget // max(per_row, 1))
    max_rows = min(max_rows, max(B // 2, sublane))  # >=2 grid steps when possible
    tb = min(B, (max_rows // sublane) * sublane)
    while B % tb:
        tb -= sublane
    return tb


def control_unit_forward(step, context, question, control, params, *,
                         batch_tile=None):
    """Pallas implementation of ControlUnit.forward.

    Returns (next_control [B, D], attn [B, S, 1]); `attn` is what the PyTorch
    module appends to self.saved_attn.
    """
    B, S, D = context.shape
    max_step = params["w_pa"].shape[0]
    if isinstance(step, int):
        assert 0 <= step < max_step

    ctx_isz = jnp.dtype(context.dtype).itemsize
    act_isz = jnp.dtype(question.dtype).itemsize
    w_isz = jnp.dtype(params["w_cq_c"].dtype).itemsize
    sublane = 16 if act_isz == 2 else 8
    vmem_limit = max(16 << 20, int(_vmem_capacity_bytes() * 3 // 4))

    if batch_tile is None:
        batch_tile = _pick_batch_tile(B, S, D, ctx_isz, act_isz, w_isz,
                                      sublane, vmem_limit)
    TB = batch_tile
    assert B % TB == 0 and (TB == B or TB % 8 == 0), (
        "batch_tile must divide B and be a multiple of 8 (or equal B)")

    step_arr = jnp.asarray([step], dtype=jnp.int32)

    grid_spec = pltpu.PrefetchScalarGridSpec(
        num_scalar_prefetch=1,
        grid=(B // TB,),
        in_specs=[
            pl.BlockSpec((TB, D), lambda i, s: (i, 0)),            # question
            pl.BlockSpec((TB, D), lambda i, s: (i, 0)),            # control
            pl.BlockSpec((TB, S, D), lambda i, s: (i, 0, 0)),      # context
            pl.BlockSpec((1, D, D), lambda i, s: (s[0], 0, 0)),    # w_pa[step]
            pl.BlockSpec((1, 1, D), lambda i, s: (s[0], 0, 0)),    # b_pa[step]
            pl.BlockSpec((D, D), lambda i, s: (0, 0)),             # w_cq (control half)
            pl.BlockSpec((D, D), lambda i, s: (0, 0)),             # w_cq (pos-aware half)
            pl.BlockSpec((1, D), lambda i, s: (0, 0)),             # b_cq
            pl.BlockSpec((1, D), lambda i, s: (0, 0)),             # w_attn
        ],
        out_specs=[
            pl.BlockSpec((TB, D), lambda i, s: (i, 0)),            # next_control
            pl.BlockSpec((TB, S), lambda i, s: (i, 0)),            # attn (lane-dense)
        ],
    )

    next_control, attn2d = pl.pallas_call(
        control_unit_kernel,
        grid_spec=grid_spec,
        out_shape=(
            jax.ShapeDtypeStruct((B, D), context.dtype),
            jax.ShapeDtypeStruct((B, S), jnp.float32),
        ),
        compiler_params=pltpu.CompilerParams(
            dimension_semantics=("parallel",),       # batch tiles are independent
            vmem_limit_bytes=int(vmem_limit),
        ),
    )(
        step_arr,
        question, control, context,
        params["w_pa"], params["b_pa"],
        params["w_cq_c"], params["w_cq_p"], params["b_cq"],
        params["w_attn"],
    )
    # Match the PyTorch module's [B, S, 1] attention shape outside the kernel
    # (keeps the in-kernel store lane-dense).
    return next_control, attn2d[:, :, None]


def control_unit_reference(step, context, question, control, params):
    """Pure-JAX reference mirroring the PyTorch module."""
    pa = question @ params["w_pa"][step] + params["b_pa"][step, 0]
    cq = control @ params["w_cq_c"] + pa @ params["w_cq_p"] + params["b_cq"][0]
    prod = cq[:, None, :] * context
    logits = (jnp.sum(prod * params["w_attn"][0], axis=-1, keepdims=True)
              + params["b_attn"][0])
    attn = jax.nn.softmax(logits, axis=1)
    next_control = jnp.sum(attn * context, axis=1)
    return next_control, attn


def make_params(key, dim, max_step):
    """Deterministic synthetic parameters (xavier-ish scaling, zero biases)."""
    ks = jax.random.split(key, 4)
    scale1 = (2.0 / (dim + dim)) ** 0.5
    scale2 = (2.0 / (3 * dim)) ** 0.5
    scale3 = (2.0 / (dim + 1)) ** 0.5
    # PyTorch Linear weight is [out, in]; store input-major ([in, out]) here.
    w_pa = scale1 * jax.random.normal(ks[0], (max_step, dim, dim), jnp.float32)
    b_pa = jnp.zeros((max_step, 1, dim), jnp.float32)
    w_cq_full = scale2 * jax.random.normal(ks[1], (2 * dim, dim), jnp.float32)
    w_cq_c = w_cq_full[:dim]          # acts on `control`
    w_cq_p = w_cq_full[dim:]          # acts on `position_aware`
    b_cq = jnp.zeros((1, dim), jnp.float32)
    w_attn = scale3 * jax.random.normal(ks[2], (1, dim), jnp.float32)
    b_attn = jnp.zeros((1,), jnp.float32)   # only used by the reference; the
    # kernel drops it (softmax is shift-invariant, logits are never returned).
    return dict(w_pa=w_pa, b_pa=b_pa, w_cq_c=w_cq_c, w_cq_p=w_cq_p,
                b_cq=b_cq, w_attn=w_attn, b_attn=b_attn)


if __name__ == "__main__":
    B, S, D, MAX_STEP = 16, 16, 32, 4
    step = 2

    key = jax.random.PRNGKey(0)
    k_ctx, k_q, k_c, k_p = jax.random.split(key, 4)
    context = jax.random.normal(k_ctx, (B, S, D), jnp.float32)
    question = jax.random.normal(k_q, (B, D), jnp.float32)
    control = jax.random.normal(k_c, (B, D), jnp.float32)
    params = make_params(k_p, D, MAX_STEP)

    # Auto tile selection: picks TB=8 here -> grid=(2,), exercising the
    # batch-tiled / pipelined path and the per-chip VMEM budgeting.
    next_control, attn = control_unit_forward(step, context, question, control,
                                              params)
    jax.block_until_ready(next_control)
    jax.block_until_ready(attn)

    ref_next, ref_attn = control_unit_reference(step, context, question, control,
                                                params)
    # MXU reassociation + EUP approx reciprocal -> ~1e-3 tolerance.
    assert next_control.shape == (B, D) and attn.shape == (B, S, 1)
    assert jnp.allclose(attn, ref_attn, atol=2e-3, rtol=2e-3), "attn mismatch"
    assert jnp.allclose(next_control, ref_next, atol=2e-3, rtol=2e-3), \
        "next_control mismatch"

    print("KERNEL_OK")
</pallas_src>

<mosaic_0001>
module attributes {stable_mosaic.version = 11 : i64} {
  func.func @control_unit_kernel(%arg0: i32, %arg1: memref<1xi32, #tpu.memory_space<smem>>, %arg2: memref<8x32xf32, #tpu.memory_space<vmem>>, %arg3: memref<8x32xf32, #tpu.memory_space<vmem>>, %arg4: memref<8x16x32xf32, #tpu.memory_space<vmem>>, %arg5: memref<1x32x32xf32, #tpu.memory_space<vmem>>, %arg6: memref<1x1x32xf32, #tpu.memory_space<vmem>>, %arg7: memref<32x32xf32, #tpu.memory_space<vmem>>, %arg8: memref<32x32xf32, #tpu.memory_space<vmem>>, %arg9: memref<1x32xf32, #tpu.memory_space<vmem>>, %arg10: memref<1x32xf32, #tpu.memory_space<vmem>>, %arg11: memref<8x32xf32, #tpu.memory_space<vmem>>, %arg12: memref<8x16xf32, #tpu.memory_space<vmem>>) attributes {dimension_semantics = [#tpu.dimension_semantics<parallel>], iteration_bounds = array<i64: 2>, scalar_prefetch = 1 : i64, scratch_operands = 0 : i64, tpu.core_type = #tpu.core_type<tc>, window_params = [{transform_indices = @transform_0, window_bounds = array<i64: 8, 32>}, {transform_indices = @transform_1, window_bounds = array<i64: 8, 32>}, {transform_indices = @transform_2, window_bounds = array<i64: 8, 16, 32>}, {transform_indices = @transform_3, window_bounds = array<i64: 1, 32, 32>}, {transform_indices = @transform_4, window_bounds = array<i64: 1, 1, 32>}, {pipeline_mode = #tpu.pipeline_mode<synchronous>, transform_indices = @transform_5, window_bounds = array<i64: 32, 32>}, {pipeline_mode = #tpu.pipeline_mode<synchronous>, transform_indices = @transform_6, window_bounds = array<i64: 32, 32>}, {pipeline_mode = #tpu.pipeline_mode<synchronous>, transform_indices = @transform_7, window_bounds = array<i64: 1, 32>}, {pipeline_mode = #tpu.pipeline_mode<synchronous>, transform_indices = @transform_8, window_bounds = array<i64: 1, 32>}, {transform_indices = @transform_9, window_bounds = array<i64: 8, 32>}, {transform_indices = @transform_10, window_bounds = array<i64: 8, 16>}]} {
    %c0 = arith.constant 0 : index
    %c0_0 = arith.constant 0 : index
    %c0_1 = arith.constant 0 : index
    %0 = vector.load %arg4[%c0, %c0_0, %c0_1] : memref<8x16x32xf32, #tpu.memory_space<vmem>>, vector<8x16x32xf32>
    %c0_2 = arith.constant 0 : index
    %c0_3 = arith.constant 0 : index
    %1 = vector.load %arg2[%c0_2, %c0_3] : memref<8x32xf32, #tpu.memory_space<vmem>>, vector<8x32xf32>
    %c0_4 = arith.constant 0 : index
    %c0_5 = arith.constant 0 : index
    %2 = vector.load %arg3[%c0_4, %c0_5] : memref<8x32xf32, #tpu.memory_space<vmem>>, vector<8x32xf32>
    %c0_6 = arith.constant 0 : index
    %c0_7 = arith.constant 0 : index
    %c0_8 = arith.constant 0 : index
    %3 = vector.load %arg5[%c0_6, %c0_7, %c0_8] : memref<1x32x32xf32, #tpu.memory_space<vmem>>, vector<1x32x32xf32>
    %4 = vector.shape_cast %3 : vector<1x32x32xf32> to vector<32x32xf32>
    %cst = arith.constant dense<0.000000e+00> : vector<8x32xf32>
    %5 = tpu.matmul %1, %4, %cst {dimension_numbers = #tpu.dot_dimension_numbers<[1], [0], [0], [1], [0, 0, 1, 1], [], []>} : vector<8x32xf32>, vector<32x32xf32>, vector<8x32xf32> -> vector<8x32xf32>
    %c0_9 = arith.constant 0 : index
    %c0_10 = arith.constant 0 : index
    %c0_11 = arith.constant 0 : index
    %6 = vector.load %arg6[%c0_9, %c0_10, %c0_11] : memref<1x1x32xf32, #tpu.memory_space<vmem>>, vector<1x1x32xf32>
    %7 = vector.shape_cast %6 : vector<1x1x32xf32> to vector<1x32xf32>
    %8 = vector.broadcast %7 : vector<1x32xf32> to vector<8x32xf32>
    %9 = arith.addf %5, %8 : vector<8x32xf32>
    %c0_12 = arith.constant 0 : index
    %c0_13 = arith.constant 0 : index
    %10 = vector.load %arg7[%c0_12, %c0_13] : memref<32x32xf32, #tpu.memory_space<vmem>>, vector<32x32xf32>
    %cst_14 = arith.constant dense<0.000000e+00> : vector<8x32xf32>
    %11 = tpu.matmul %2, %10, %cst_14 {dimension_numbers = #tpu.dot_dimension_numbers<[1], [0], [0], [1], [0, 0, 1, 1], [], []>} : vector<8x32xf32>, vector<32x32xf32>, vector<8x32xf32> -> vector<8x32xf32>
    %c0_15 = arith.constant 0 : index
    %c0_16 = arith.constant 0 : index
    %12 = vector.load %arg8[%c0_15, %c0_16] : memref<32x32xf32, #tpu.memory_space<vmem>>, vector<32x32xf32>
    %cst_17 = arith.constant dense<0.000000e+00> : vector<8x32xf32>
    %13 = tpu.matmul %9, %12, %cst_17 {dimension_numbers = #tpu.dot_dimension_numbers<[1], [0], [0], [1], [0, 0, 1, 1], [], []>} : vector<8x32xf32>, vector<32x32xf32>, vector<8x32xf32> -> vector<8x32xf32>
    %14 = arith.addf %11, %13 : vector<8x32xf32>
    %c0_18 = arith.constant 0 : index
    %c0_19 = arith.constant 0 : index
    %15 = vector.load %arg9[%c0_18, %c0_19] : memref<1x32xf32, #tpu.memory_space<vmem>>, vector<1x32xf32>
    %16 = vector.broadcast %15 : vector<1x32xf32> to vector<8x32xf32>
    %17 = arith.addf %14, %16 : vector<8x32xf32>
    %c0_20 = arith.constant 0 : index
    %c0_21 = arith.constant 0 : index
    %18 = vector.load %arg10[%c0_20, %c0_21] : memref<1x32xf32, #tpu.memory_space<vmem>>, vector<1x32xf32>
    %19 = vector.broadcast %18 : vector<1x32xf32> to vector<8x32xf32>
    %20 = arith.mulf %17, %19 : vector<8x32xf32>
    %21 = vector.shape_cast %20 : vector<8x32xf32> to vector<8x1x32xf32>
    %22 = vector.broadcast %21 : vector<8x1x32xf32> to vector<8x16x32xf32>
    %23 = arith.mulf %0, %22 : vector<8x16x32xf32>
    %cst_22 = arith.constant dense<0.000000e+00> : vector<8x16xf32>
    %24 = vector.multi_reduction <add>, %23, %cst_22 [2] : vector<8x16x32xf32> to vector<8x16xf32>
    %cst_23 = arith.constant dense<0xFF800000> : vector<8xf32>
    %25 = vector.multi_reduction <maximumf>, %24, %cst_23 [1] : vector<8x16xf32> to vector<8xf32>
    %26 = vector.shape_cast %25 : vector<8xf32> to vector<8x1xf32>
    %27 = vector.broadcast %26 : vector<8x1xf32> to vector<8x16xf32>
    %28 = arith.subf %24, %27 : vector<8x16xf32>
    %29 = math.exp %28 : vector<8x16xf32>
    %cst_24 = arith.constant dense<0.000000e+00> : vector<8xf32>
    %30 = vector.multi_reduction <add>, %29, %cst_24 [1] : vector<8x16xf32> to vector<8xf32>
    %31 = vector.shape_cast %30 : vector<8xf32> to vector<8x1xf32>
    %32 = tpu.reciprocal %31 {approx = true} : vector<8x1xf32> -> vector<8x1xf32>
    %33 = vector.broadcast %32 : vector<8x1xf32> to vector<8x16xf32>
    %34 = arith.mulf %29, %33 : vector<8x16xf32>
    %c0_25 = arith.constant 0 : index
    %c0_26 = arith.constant 0 : index
    %35 = vector.load %arg12[%c0_25, %c0_26] : memref<8x16xf32, #tpu.memory_space<vmem>>, vector<8x16xf32>
    tpu.vector_store %arg12[%c0_25, %c0_26], %34 {strides = array<i32>} : memref<8x16xf32, #tpu.memory_space<vmem>>, vector<8x16xf32>,
    %36 = vector.shape_cast %34 : vector<8x16xf32> to vector<8x1x16xf32>
    "tpu.trace_start"() <{level = 10 : i32, message = "bqs,bsd->bqd"}> : () -> ()
    %cst_27 = arith.constant dense<0.000000e+00> : vector<8x1x32xf32>
    %37 = tpu.matmul %36, %0, %cst_27 {dimension_numbers = #tpu.dot_dimension_numbers<[2], [1], [1], [2], [0, 0, 0, 1, 1, 2], [0], [0]>} : vector<8x1x16xf32>, vector<8x16x32xf32>, vector<8x1x32xf32> -> vector<8x1x32xf32>
    "tpu.trace_stop"() : () -> ()
    %38 = vector.shape_cast %37 : vector<8x1x32xf32> to vector<8x32xf32>
    %c0_28 = arith.constant 0 : index
    %c0_29 = arith.constant 0 : index
    %39 = vector.load %arg11[%c0_28, %c0_29] : memref<8x32xf32, #tpu.memory_space<vmem>>, vector<8x32xf32>
    tpu.vector_store %arg11[%c0_28, %c0_29], %38 {strides = array<i32>} : memref<8x32xf32, #tpu.memory_space<vmem>>, vector<8x32xf32>,
    return
  }
  func.func @transform_0(%arg0: i32, %arg1: memref<1xi32, #tpu.memory_space<smem>>) -> (i32, i32) {
    %c0_i32 = arith.constant 0 : i32
    %c0_i32_0 = arith.constant 0 : i32
    return %arg0, %c0_i32 : i32, i32
  }
  func.func @transform_1(%arg0: i32, %arg1: memref<1xi32, #tpu.memory_space<smem>>) -> (i32, i32) {
    %c0_i32 = arith.constant 0 : i32
    %c0_i32_0 = arith.constant 0 : i32
    return %arg0, %c0_i32 : i32, i32
  }
  func.func @transform_2(%arg0: i32, %arg1: memref<1xi32, #tpu.memory_space<smem>>) -> (i32, i32, i32) {
    %c0_i32 = arith.constant 0 : i32
    %c0_i32_0 = arith.constant 0 : i32
    %c0_i32_1 = arith.constant 0 : i32
    return %arg0, %c0_i32, %c0_i32_0 : i32, i32, i32
  }
  func.func @transform_3(%arg0: i32, %arg1: memref<1xi32, #tpu.memory_space<smem>>) -> (i32, i32, i32) {
    %c0 = arith.constant 0 : index
    %0 = memref.load %arg1[%c0] : memref<1xi32, #tpu.memory_space<smem>>
    %c0_i32 = arith.constant 0 : i32
    %c0_i32_0 = arith.constant 0 : i32
    %c0_i32_1 = arith.constant 0 : i32
    return %0, %c0_i32, %c0_i32_0 : i32, i32, i32
  }
  func.func @transform_4(%arg0: i32, %arg1: memref<1xi32, #tpu.memory_space<smem>>) -> (i32, i32, i32) {
    %c0 = arith.constant 0 : index
    %0 = memref.load %arg1[%c0] : memref<1xi32, #tpu.memory_space<smem>>
    %c0_i32 = arith.constant 0 : i32
    %c0_i32_0 = arith.constant 0 : i32
    %c0_i32_1 = arith.constant 0 : i32
    return %0, %c0_i32, %c0_i32_0 : i32, i32, i32
  }
  func.func @transform_5(%arg0: i32, %arg1: memref<1xi32, #tpu.memory_space<smem>>) -> (i32, i32) {
    %c0_i32 = arith.constant 0 : i32
    %c0_i32_0 = arith.constant 0 : i32
    %c0_i32_1 = arith.constant 0 : i32
    return %c0_i32, %c0_i32_0 : i32, i32
  }
  func.func @transform_6(%arg0: i32, %arg1: memref<1xi32, #tpu.memory_space<smem>>) -> (i32, i32) {
    %c0_i32 = arith.constant 0 : i32
    %c0_i32_0 = arith.constant 0 : i32
    %c0_i32_1 = arith.constant 0 : i32
    return %c0_i32, %c0_i32_0 : i32, i32
  }
  func.func @transform_7(%arg0: i32, %arg1: memref<1xi32, #tpu.memory_space<smem>>) -> (i32, i32) {
    %c0_i32 = arith.constant 0 : i32
    %c0_i32_0 = arith.constant 0 : i32
    %c0_i32_1 = arith.constant 0 : i32
    return %c0_i32, %c0_i32_0 : i32, i32
  }
  func.func @transform_8(%arg0: i32, %arg1: memref<1xi32, #tpu.memory_space<smem>>) -> (i32, i32) {
    %c0_i32 = arith.constant 0 : i32
    %c0_i32_0 = arith.constant 0 : i32
    %c0_i32_1 = arith.constant 0 : i32
    return %c0_i32, %c0_i32_0 : i32, i32
  }
  func.func @transform_9(%arg0: i32, %arg1: memref<1xi32, #tpu.memory_space<smem>>) -> (i32, i32) {
    %c0_i32 = arith.constant 0 : i32
    %c0_i32_0 = arith.constant 0 : i32
    return %arg0, %c0_i32 : i32, i32
  }
  func.func @transform_10(%arg0: i32, %arg1: memref<1xi32, #tpu.memory_space<smem>>) -> (i32, i32) {
    %c0_i32 = arith.constant 0 : i32
    %c0_i32_0 = arith.constant 0 : i32
    return %arg0, %c0_i32 : i32, i32
  }
}

</mosaic_0001>

<llo_original>
// kernel: tpu_custom_call.1
$region0: #{tpu_custom_call.1}
  #allocation0 [shape = 'u32[]', space=smem, size = 0x4, offset = 0x4, fixed_abs, tag = 'smem constant byte address 0x4 - core index']
  #allocation1 [shape = 'u32[72,128]{1,0:T(1,128)}', space=vmem, size = 0x9000, scoped, tag = 'internal scratch']
  #allocation2 [shape = 's32[1]{0}', space=sflag, size = 0x4, scoped, tag = 'scoped memory for tpu_custom_call.1']
  #allocation3 [shape = 's32[1]{0:T(128)S(6)}', space=smem, size = 0x200, scoped, tag = 'prefetched SMEM operand 0']
  %s0 = inlined_call_operand.<no memory space> [shape: s32[1], index: 0, kind: input, shape index: {}]
  %s1 = inlined_call_operand.hbm [shape: f32[16,32], index: 1, kind: input, shape index: {}]
  %s2 = inlined_call_operand.hbm [shape: f32[16,32], index: 2, kind: input, shape index: {}]
  %s3 = inlined_call_operand.hbm [shape: f32[16,16,32], index: 3, kind: input, shape index: {}]
  %s4 = inlined_call_operand.hbm [shape: f32[4,32,32], index: 4, kind: input, shape index: {}]
  %s5 = inlined_call_operand.vmem [shape: f32[4,1,32], index: 5, kind: input, shape index: {}]
  %s6 = inlined_call_operand.hbm [shape: f32[32,32], index: 6, kind: input, shape index: {}]
  %s7 = inlined_call_operand.hbm [shape: f32[32,32], index: 7, kind: input, shape index: {}]
  %s8 = inlined_call_operand.vmem [shape: f32[1,32], index: 8, kind: input, shape index: {}]
  %s9 = inlined_call_operand.vmem [shape: f32[1,32], index: 9, kind: input, shape index: {}]
  %s10 = inlined_call_operand.hbm [shape: f32[16,32], index: 10, kind: output, shape index: {0}]
  %s11 = inlined_call_operand.hbm [shape: f32[16,16], index: 11, kind: output, shape index: {1}]
  %12 = xla_tuple %s10, %s11
  %s13 = sld [smem:[#allocation0]]
  $region101: #{tpu_custom_call.1} parent=0
    _
  %s15 = ssub.s32 1, %s13
  %s16 = scalar_select 0, %s15, %s13
  %17 = sst [smem:[#allocation3]] %s0
  $region1: #{tpu_custom_call.1} parent=0
    #allocation4 [shape = 'u8[8192]{0}', space=vmem, size = 0x2000, scoped, tag = 'input window, operand 1']
    #allocation5 [shape = 's32[2]{0}', space=sflag, size = 0x8, scoped, tag = 'scoped memory for tpu_custom_call.1']
    #allocation6 [shape = 's32[2]{0}', space=sflag, size = 0x8, scoped, tag = 'scoped memory for tpu_custom_call.1']
    #allocation7 [shape = 'u8[8192]{0}', space=vmem, size = 0x2000, scoped, tag = 'input window, operand 2']
    #allocation8 [shape = 's32[2]{0}', space=sflag, size = 0x8, scoped, tag = 'scoped memory for tpu_custom_call.1']
    #allocation9 [shape = 'u8[131072]{0}', space=vmem, size = 0x20000, scoped, tag = 'input window, operand 3']
    #allocation10 [shape = 'u8[16384]{0}', space=vmem, size = 0x4000, scoped, tag = 'input window, operand 4, single buffered']
    #allocation11 [shape = 's32[1]{0}', space=sflag, size = 0x4, scoped, tag = 'scoped memory for tpu_custom_call.1']
    #allocation12 [shape = 'u8[16384]{0}', space=vmem, size = 0x4000, scoped, tag = 'input window, operand 6, single buffered']
    #allocation13 [shape = 'u8[16384]{0}', space=vmem, size = 0x4000, scoped, tag = 'input window, operand 7, single buffered']
    #allocation14 [shape = 's32[1]{0}', space=sflag, size = 0x4, scoped, tag = 'scoped memory for tpu_custom_call.1']
    #allocation15 [shape = 'u8[8192]{0}', space=vmem, size = 0x2000, scoped, tag = 'output window, operand 0']
    #allocation16 [shape = 'u8[8192]{0}', space=vmem, size = 0x2000, scoped, tag = 'output window, operand 1']
    #allocation17 [shape = 's32[2]{0}', space=sflag, size = 0x8, scoped, tag = 'scoped memory for tpu_custom_call.1']
    %18 = vsyncpa [#allocation5], 0
    %s19 = scalar_lea.sflag [#allocation5], 1
    %20 = vsyncpa %s19, 0
    %21 = vsyncpa [#allocation8], 0
    %s22 = scalar_lea.sflag [#allocation8], 1
    %23 = vsyncpa %s22, 0
    %24 = vsyncpa [#allocation11], 0
    %25 = vsyncpa [#allocation14], 0
    %26 = vsyncpa [#allocation6], 0
    %s27 = scalar_lea.sflag [#allocation6], 1
    %28 = vsyncpa %s27, 0
    %29 = vsyncpa [#allocation17], 0
    %s30 = scalar_lea.sflag [#allocation17], 1
    %31 = vsyncpa %s30, 0
    loop: start=0, step=1, limit=4
    $region2: #{tpu_custom_call.1} parent=1 // loop_pre_header
      _
    $region3: #{tpu_custom_call.1} parent=1 // loop_header
      %s33 = sphi 0, %s37
      %p34 = scmp.ge.s32.totalorder %s33, 4
      %s43 = sphi 0, %s45
      %s46 = sphi 0, %s43
      %s47 = sphi 0, %s46
      %s63 = sphi 0, %s47
      %s69 = sphi 0, %s71
      %s72 = sphi 0, %s69
      %s73 = sphi 0, %s72
      %s89 = sphi 0, %s73
      %s95 = sphi 0, %s97
      %s98 = sphi 0, %s95
      %s99 = sphi 0, %s98
      %s115 = sphi 0, %s99
      %s123 = sphi 0, %s125
      %s126 = sphi 0, %s123
      %s127 = sphi 0, %s126
      %s143 = sphi 0, %s127
      %s151 = sphi 0, %s153
      %s154 = sphi 0, %s151
      %s155 = sphi 0, %s154
      %s171 = sphi 0, %s155
      %s175 = sphi 0, %s175
      %s177 = sphi 0, %s175
      %s178 = sphi 0, %s177
      %s192 = sphi 0, %s178
      %s196 = sphi 0, %s196
      %s198 = sphi 0, %s196
      %s199 = sphi 0, %s198
      %s213 = sphi 0, %s199
      %s217 = sphi 0, %s217
      %s219 = sphi 0, %s217
      %s220 = sphi 0, %s219
      %s234 = sphi 0, %s220
      %s238 = sphi 0, %s238
      %s240 = sphi 0, %s238
      %s241 = sphi 0, %s240
      %s255 = sphi 0, %s241
      %s261 = sphi 0, %s263
      %s264 = sphi 0, %s261
      %s265 = sphi 0, %s264
      %s281 = sphi 0, %s265
      %s287 = sphi 0, %s289
      %s290 = sphi 0, %s287
      %s291 = sphi 0, %s290
      %s307 = sphi 0, %s291
    $region4: #{tpu_custom_call.1} parent=1 // loop_header_branch
      %36 = sbr.rel (%p34) target = $region8
    $region5: #{tpu_custom_call.1} parent=1 // loop_body
      %s38 = ssub.s32 %s33, 1
      %s39 = ssub.s32 %s33, 2
      %s40 = sadd.s32 %s33, 1
      %s41 = ssub.s32 %s33, %s40
      %p42 = scmp.eq.s32.totalorder %s41, 0
      %s44 = sadd.s32 %s43, 1
      %s45 = scalar_select %p42, %s43, %s44
      %p48 = pneg %p42
      %p49 = scmp.eq.s32.totalorder %s33, 1
      %p50 = por %p48, %p49
      %p51 = scmp.ne.s32.totalorder %s43, %s46
      %p52 = scmp.eq.s32.totalorder %s33, 0
      %p53 = por %p51, %p52
      %p54 = scmp.ne.s32.totalorder %s43, %s46
      %p55 = scmp.eq.s32.totalorder %s38, 1
      %p56 = por %p54, %p55
      %p57 = scmp.ne.s32.totalorder %s46, %s47
      %p58 = scmp.eq.s32.totalorder %s38, 0
      %p59 = por %p57, %p58
      %p60 = scmp.ne.s32.totalorder %s46, %s47
      %p61 = scmp.eq.s32.totalorder %s39, 1
      %p62 = por %p60, %p61
      %p64 = scmp.ne.s32.totalorder %s47, %s63
      %p65 = scmp.eq.s32.totalorder %s39, 0
      %p66 = por %p64, %p65
      %s67 = ssub.s32 %s33, %s40
      %p68 = scmp.eq.s32.totalorder %s67, 0
      %s70 = sadd.s32 %s69, 1
      %s71 = scalar_select %p68, %s69, %s70
      %p74 = pneg %p68
      %p75 = scmp.eq.s32.totalorder %s33, 1
      %p76 = por %p74, %p75
      %p77 = scmp.ne.s32.totalorder %s69, %s72
      %p78 = scmp.eq.s32.totalorder %s33, 0
      %p79 = por %p77, %p78
      %p80 = scmp.ne.s32.totalorder %s69, %s72
      %p81 = scmp.eq.s32.totalorder %s38, 1
      %p82 = por %p80, %p81
      %p83 = scmp.ne.s32.totalorder %s72, %s73
      %p84 = scmp.eq.s32.totalorder %s38, 0
      %p85 = por %p83, %p84
      %p86 = scmp.ne.s32.totalorder %s72, %s73
      %p87 = scmp.eq.s32.totalorder %s39, 1
      %p88 = por %p86, %p87
      %p90 = scmp.ne.s32.totalorder %s73, %s89
      %p91 = scmp.eq.s32.totalorder %s39, 0
      %p92 = por %p90, %p91
      %s93 = ssub.s32 %s33, %s40
      %p94 = scmp.eq.s32.totalorder %s93, 0
      %s96 = sadd.s32 %s95, 1
      %s97 = scalar_select %p94, %s95, %s96
      %p100 = pneg %p94
      %p101 = scmp.eq.s32.totalorder %s33, 1
      %p102 = por %p100, %p101
      %p103 = scmp.ne.s32.totalorder %s95, %s98
      %p104 = scmp.eq.s32.totalorder %s33, 0
      %p105 = por %p103, %p104
      %p106 = scmp.ne.s32.totalorder %s95, %s98
      %p107 = scmp.eq.s32.totalorder %s38, 1
      %p108 = por %p106, %p107
      %p109 = scmp.ne.s32.totalorder %s98, %s99
      %p110 = scmp.eq.s32.totalorder %s38, 0
      %p111 = por %p109, %p110
      %p112 = scmp.ne.s32.totalorder %s98, %s99
      %p113 = scmp.eq.s32.totalorder %s39, 1
      %p114 = por %p112, %p113
      %p116 = scmp.ne.s32.totalorder %s99, %s115
      %p117 = scmp.eq.s32.totalorder %s39, 0
      %p118 = por %p116, %p117
      %s119 = sld [smem:[#allocation3]]
      %s120 = sld [smem:[#allocation3]]
      %s121 = ssub.s32 %s119, %s120
      %p122 = scmp.eq.s32.totalorder %s121, 0
      %s124 = sadd.s32 %s123, 1
      %s125 = scalar_select %p122, %s123, %s124
      %p128 = pneg %p122
      %p129 = scmp.eq.s32.totalorder %s33, 1
      %p130 = por %p128, %p129
      %p131 = scmp.ne.s32.totalorder %s123, %s126
      %p132 = scmp.eq.s32.totalorder %s33, 0
      %p133 = por %p131, %p132
      %p134 = scmp.ne.s32.totalorder %s123, %s126
      %p135 = scmp.eq.s32.totalorder %s38, 1
      %p136 = por %p134, %p135
      %p137 = scmp.ne.s32.totalorder %s126, %s127
      %p138 = scmp.eq.s32.totalorder %s38, 0
      %p139 = por %p137, %p138
      %p140 = scmp.ne.s32.totalorder %s126, %s127
      %p141 = scmp.eq.s32.totalorder %s39, 1
      %p142 = por %p140, %p141
      %p144 = scmp.ne.s32.totalorder %s127, %s143
      %p145 = scmp.eq.s32.totalorder %s39, 0
      %p146 = por %p144, %p145
      %s147 = sld [smem:[#allocation3]]
      %s148 = sld [smem:[#allocation3]]
      %s149 = ssub.s32 %s147, %s148
      %p150 = scmp.eq.s32.totalorder %s149, 0
      %s152 = sadd.s32 %s151, 1
      %s153 = scalar_select %p150, %s151, %s152
      %p156 = pneg %p150
      %p157 = scmp.eq.s32.totalorder %s33, 1
      %p158 = por %p156, %p157
      %p159 = scmp.ne.s32.totalorder %s151, %s154
      %p160 = scmp.eq.s32.totalorder %s33, 0
      %p161 = por %p159, %p160
      %p162 = scmp.ne.s32.totalorder %s151, %s154
      %p163 = scmp.eq.s32.totalorder %s38, 1
      %p164 = por %p162, %p163
      %p165 = scmp.ne.s32.totalorder %s154, %s155
      %p166 = scmp.eq.s32.totalorder %s38, 0
      %p167 = por %p165, %p166
      %p168 = scmp.ne.s32.totalorder %s154, %s155
      %p169 = scmp.eq.s32.totalorder %s39, 1
      %p170 = por %p168, %p169
      %p172 = scmp.ne.s32.totalorder %s155, %s171
      %p173 = scmp.eq.s32.totalorder %s39, 0
      %p174 = por %p172, %p173
      %s176 = sadd.s32 %s175, 1
      %p179 = scmp.eq.s32.totalorder %s33, 1
      %p180 = scmp.ne.s32.totalorder %s175, %s177
      %p181 = scmp.eq.s32.totalorder %s33, 0
      %p182 = por %p180, %p181
      %p183 = scmp.ne.s32.totalorder %s175, %s177
      %p184 = scmp.eq.s32.totalorder %s38, 1
      %p185 = por %p183, %p184
      %p186 = scmp.ne.s32.totalorder %s177, %s178
      %p187 = scmp.eq.s32.totalorder %s38, 0
      %p188 = por %p186, %p187
      %p189 = scmp.ne.s32.totalorder %s177, %s178
      %p190 = scmp.eq.s32.totalorder %s39, 1
      %p191 = por %p189, %p190
      %p193 = scmp.ne.s32.totalorder %s178, %s192
      %p194 = scmp.eq.s32.totalorder %s39, 0
      %p195 = por %p193, %p194
      %s197 = sadd.s32 %s196, 1
      %p200 = scmp.eq.s32.totalorder %s33, 1
      %p201 = scmp.ne.s32.totalorder %s196, %s198
      %p202 = scmp.eq.s32.totalorder %s33, 0
      %p203 = por %p201, %p202
      %p204 = scmp.ne.s32.totalorder %s196, %s198
      %p205 = scmp.eq.s32.totalorder %s38, 1
      %p206 = por %p204, %p205
      %p207 = scmp.ne.s32.totalorder %s198, %s199
      %p208 = scmp.eq.s32.totalorder %s38, 0
      %p209 = por %p207, %p208
      %p210 = scmp.ne.s32.totalorder %s198, %s199
      %p211 = scmp.eq.s32.totalorder %s39, 1
      %p212 = por %p210, %p211
      %p214 = scmp.ne.s32.totalorder %s199, %s213
      %p215 = scmp.eq.s32.totalorder %s39, 0
      %p216 = por %p214, %p215
      %s218 = sadd.s32 %s217, 1
      %p221 = scmp.eq.s32.totalorder %s33, 1
      %p222 = scmp.ne.s32.totalorder %s217, %s219
      %p223 = scmp.eq.s32.totalorder %s33, 0
      %p224 = por %p222, %p223
      %p225 = scmp.ne.s32.totalorder %s217, %s219
      %p226 = scmp.eq.s32.totalorder %s38, 1
      %p227 = por %p225, %p226
      %p228 = scmp.ne.s32.totalorder %s219, %s220
      %p229 = scmp.eq.s32.totalorder %s38, 0
      %p230 = por %p228, %p229
      %p231 = scmp.ne.s32.totalorder %s219, %s220
      %p232 = scmp.eq.s32.totalorder %s39, 1
      %p233 = por %p231, %p232
      %p235 = scmp.ne.s32.totalorder %s220, %s234
      %p236 = scmp.eq.s32.totalorder %s39, 0
      %p237 = por %p235, %p236
      %s239 = sadd.s32 %s238, 1
      %p242 = scmp.eq.s32.totalorder %s33, 1
      %p243 = scmp.ne.s32.totalorder %s238, %s240
      %p244 = scmp.eq.s32.totalorder %s33, 0
      %p245 = por %p243, %p244
      %p246 = scmp.ne.s32.totalorder %s238, %s240
      %p247 = scmp.eq.s32.totalorder %s38, 1
      %p248 = por %p246, %p247
      %p249 = scmp.ne.s32.totalorder %s240, %s241
      %p250 = scmp.eq.s32.totalorder %s38, 0
      %p251 = por %p249, %p250
      %p252 = scmp.ne.s32.totalorder %s240, %s241
      %p253 = scmp.eq.s32.totalorder %s39, 1
      %p254 = por %p252, %p253
      %p256 = scmp.ne.s32.totalorder %s241, %s255
      %p257 = scmp.eq.s32.totalorder %s39, 0
      %p258 = por %p256, %p257
      %s259 = ssub.s32 %s33, %s40
      %p260 = scmp.eq.s32.totalorder %s259, 0
      %s262 = sadd.s32 %s261, 1
      %s263 = scalar_select %p260, %s261, %s262
      %p266 = pneg %p260
      %p267 = scmp.eq.s32.totalorder %s33, 1
      %p268 = por %p266, %p267
      %p269 = scmp.ne.s32.totalorder %s261, %s264
      %p270 = scmp.eq.s32.totalorder %s33, 0
      %p271 = por %p269, %p270
      %p272 = scmp.ne.s32.totalorder %s261, %s264
      %p273 = scmp.eq.s32.totalorder %s38, 1
      %p274 = por %p272, %p273
      %p275 = scmp.ne.s32.totalorder %s264, %s265
      %p276 = scmp.eq.s32.totalorder %s38, 0
      %p277 = por %p275, %p276
      %p278 = scmp.ne.s32.totalorder %s264, %s265
      %p279 = scmp.eq.s32.totalorder %s39, 1
      %p280 = por %p278, %p279
      %p282 = scmp.ne.s32.totalorder %s265, %s281
      %p283 = scmp.eq.s32.totalorder %s39, 0
      %p284 = por %p282, %p283
      %s285 = ssub.s32 %s33, %s40
      %p286 = scmp.eq.s32.totalorder %s285, 0
      %s288 = sadd.s32 %s287, 1
      %s289 = scalar_select %p286, %s287, %s288
      %p292 = pneg %p286
      %p293 = scmp.eq.s32.totalorder %s33, 1
      %p294 = por %p292, %p293
      %p295 = scmp.ne.s32.totalorder %s287, %s290
      %p296 = scmp.eq.s32.totalorder %s33, 0
      %p297 = por %p295, %p296
      %p298 = scmp.ne.s32.totalorder %s287, %s290
      %p299 = scmp.eq.s32.totalorder %s38, 1
      %p300 = por %p298, %p299
      %p301 = scmp.ne.s32.totalorder %s290, %s291
      %p302 = scmp.eq.s32.totalorder %s38, 0
      %p303 = por %p301, %p302
      %p304 = scmp.ne.s32.totalorder %s290, %s291
      %p305 = scmp.eq.s32.totalorder %s39, 1
      %p306 = por %p304, %p305
      %p308 = scmp.ne.s32.totalorder %s291, %s307
      %p309 = scmp.eq.s32.totalorder %s39, 0
      %p310 = por %p308, %p309
      %p311 = scmp.le.s32.totalorder 1, %s33
      %p312 = scmp.lt.s32.totalorder %s33, 3
      %p313 = pnand %p311, %p312
      %p314 = pneg %p313
      // Predicated region
      $region9: #{tpu_custom_call.1} parent=5 // pred_check
        _
      $region10: #{tpu_custom_call.1} parent=5 // pred_check_branch
        %316 = sbr.rel (%p313) target = $region12
      $region11: #{tpu_custom_call.1} parent=5 // pred_region
        %s317 = ssub.s32 %s33, 1
        // Predicated region
        $region13: #{tpu_custom_call.1} parent=11 // pred_check
          %p318 = pneg %p139
        $region14: #{tpu_custom_call.1} parent=11 // pred_check_branch
          %320 = sbr.rel (%p318) target = $region16
        $region15: #{tpu_custom_call.1} parent=11 // pred_region
          %s321 = sld [smem:[#allocation3]]
          %323 = vsyncadd [#allocation11], 0
          %s324 = smul.addr %s321, 4
          %s325 = smul.addr %s324, 8
          %s326 = scalar_lea.hbm %s4, %s325
          %s327 = sshll.u32 %s326, 4
          %s328 = int_to_ptr.hbm [resolvable:$true] %s327
          %s329 = sshll.u32 [#allocation10], 4
          %s330 = int_to_ptr.vmem [resolvable:$true] %s329
          %335 = dma.hbm_to_vmem [thread:$0]  %s328, 512, %s330, [#allocation11], 128, 128, 8
        $region16: #{tpu_custom_call.1} parent=11 // pred_fallthru
          _
        // Predicated region
        $region17: #{tpu_custom_call.1} parent=11 // pred_check
          %p336 = pneg %p167
        $region18: #{tpu_custom_call.1} parent=11 // pred_check_branch
          %338 = sbr.rel (%p336) target = $region20
        $region19: #{tpu_custom_call.1} parent=11 // pred_region
          %s339 = sld [smem:[#allocation3]]
          %p340 = scmp.lt.s32.totalorder %s339, 3
          %s341 = scalar_select %p340, %s339, 3
          %s342 = scalar_lea.vmem %s5, %s341
          %s343 = sld [smem:[#allocation3]]
        $region20: #{tpu_custom_call.1} parent=11 // pred_fallthru
          _
        // Predicated region
        $region21: #{tpu_custom_call.1} parent=11 // pred_check
          %p344 = pneg %p188
        $region22: #{tpu_custom_call.1} parent=11 // pred_check_branch
          %346 = sbr.rel (%p344) target = $region24
        $region23: #{tpu_custom_call.1} parent=11 // pred_region
          %348 = vsyncadd [#allocation11], 0
          %s349 = sshll.u32 %s6, 4
          %s350 = int_to_ptr.hbm [resolvable:$true] %s349
          %s351 = sshll.u32 [#allocation12], 4
          %s352 = int_to_ptr.vmem [resolvable:$true] %s351
          %357 = dma.hbm_to_vmem [thread:$0]  %s350, 512, %s352, [#allocation11], 128, 128, 8
        $region24: #{tpu_custom_call.1} parent=11 // pred_fallthru
          _
        // Predicated region
        $region25: #{tpu_custom_call.1} parent=11 // pred_check
          %p358 = pneg %p209
        $region26: #{tpu_custom_call.1} parent=11 // pred_check_branch
          %360 = sbr.rel (%p358) target = $region28
        $region27: #{tpu_custom_call.1} parent=11 // pred_region
          %362 = vsyncadd [#allocation14], 0
          %s363 = sshll.u32 %s7, 4
          %s364 = int_to_ptr.hbm [resolvable:$true] %s363
          %s365 = sshll.u32 [#allocation13], 4
          %s366 = int_to_ptr.vmem [resolvable:$true] %s365
          %371 = dma.hbm_to_vmem [thread:$0]  %s364, 512, %s366, [#allocation14], 128, 128, 8
        $region28: #{tpu_custom_call.1} parent=11 // pred_fallthru
          _
        // Predicated region
        $region29: #{tpu_custom_call.1} parent=11 // pred_check
          %p372 = pneg %p230
        $region30: #{tpu_custom_call.1} parent=11 // pred_check_branch
          %374 = sbr.rel (%p372) target = $region32
        $region31: #{tpu_custom_call.1} parent=11 // pred_region
          _
        $region32: #{tpu_custom_call.1} parent=11 // pred_fallthru
          _
        // Predicated region
        $region33: #{tpu_custom_call.1} parent=11 // pred_check
          %p375 = pneg %p251
        $region34: #{tpu_custom_call.1} parent=11 // pred_check_branch
          %377 = sbr.rel (%p375) target = $region36
        $region35: #{tpu_custom_call.1} parent=11 // pred_region
          _
        $region36: #{tpu_custom_call.1} parent=11 // pred_fallthru
          _
      $region12: #{tpu_custom_call.1} parent=5 // pred_fallthru
        _
      %p378 = scmp.lt.s32.totalorder %s33, 2
      // Predicated region
      $region37: #{tpu_custom_call.1} parent=5 // pred_check
        %p379 = pneg %p378
      $region38: #{tpu_custom_call.1} parent=5 // pred_check_branch
        %381 = sbr.rel (%p379) target = $region40
      $region39: #{tpu_custom_call.1} parent=5 // pred_region
        // Predicated region
        $region41: #{tpu_custom_call.1} parent=39 // pred_check
          %p382 = pneg %p53
        $region42: #{tpu_custom_call.1} parent=39 // pred_check_branch
          %384 = sbr.rel (%p382) target = $region44
        $region43: #{tpu_custom_call.1} parent=39 // pred_region
          %s385 = sand.u32 %s43, 1
          %s386 = scalar_lea.sflag [#allocation5], %s385
          %s387 = sand.u32 %s43, 1
          %s388 = smul.addr %s387, 8
          %s389 = scalar_lea.vmem [#allocation4], %s388
          %391 = vsyncadd %s386, 0
          %s392 = smul.addr %s33, 8
          %s393 = scalar_lea.hbm %s1, %s392
          %s395 = sshll.u32 %s393, 4
          %s396 = int_to_ptr.hbm [resolvable:$true] %s395
          %s397 = sshll.u32 %s389, 4
          %s398 = int_to_ptr.vmem [resolvable:$true] %s397
          %400 = dma.hbm_to_vmem [thread:$0]  %s396, 128, %s398, %s386
        $region44: #{tpu_custom_call.1} parent=39 // pred_fallthru
          _
        // Predicated region
        $region45: #{tpu_custom_call.1} parent=39 // pred_check
          %p401 = pneg %p79
        $region46: #{tpu_custom_call.1} parent=39 // pred_check_branch
          %403 = sbr.rel (%p401) target = $region48
        $region47: #{tpu_custom_call.1} parent=39 // pred_region
          %s404 = sand.u32 %s33, 1
          %s405 = scalar_lea.sflag [#allocation8], %s404
          %s406 = sand.u32 %s69, 1
          %s407 = smul.addr %s406, 8
          %s408 = scalar_lea.vmem [#allocation7], %s407
          %410 = vsyncadd %s405, 0
          %s411 = smul.addr %s33, 8
          %s412 = scalar_lea.hbm %s2, %s411
          %s414 = sshll.u32 %s412, 4
          %s415 = int_to_ptr.hbm [resolvable:$true] %s414
          %s416 = sshll.u32 %s408, 4
          %s417 = int_to_ptr.vmem [resolvable:$true] %s416
          %419 = dma.hbm_to_vmem [thread:$0]  %s415, 128, %s417, %s405
        $region48: #{tpu_custom_call.1} parent=39 // pred_fallthru
          _
        // Predicated region
        $region49: #{tpu_custom_call.1} parent=39 // pred_check
          %p420 = pneg %p105
        $region50: #{tpu_custom_call.1} parent=39 // pred_check_branch
          %422 = sbr.rel (%p420) target = $region52
        $region51: #{tpu_custom_call.1} parent=39 // pred_region
          %s423 = sand.u32 %s33, 1
          %s424 = scalar_lea.sflag [#allocation8], %s423
          %s425 = sand.u32 %s95, 1
          %s426 = smul.addr %s425, 128
          %s427 = scalar_lea.vmem [#allocation9], %s426
          %s428 = smul.u32 8, %s33
          %430 = vsyncadd %s424, 0
          %s431 = smul.addr %s428, 2
          %s432 = smul.addr %s431, 8
          %s433 = scalar_lea.hbm %s3, %s432
          %s434 = sshll.u32 %s433, 4
          %s435 = int_to_ptr.hbm [resolvable:$true] %s434
          %s436 = sshll.u32 %s427, 4
          %s437 = int_to_ptr.vmem [resolvable:$true] %s436
          %442 = dma.hbm_to_vmem [thread:$0]  %s435, 2048, %s437, %s424, 128, 128, 8
        $region52: #{tpu_custom_call.1} parent=39 // pred_fallthru
          _
      $region40: #{tpu_custom_call.1} parent=5 // pred_fallthru
        _
      %p443 = scmp.le.s32.totalorder 1, %s33
      %p444 = scmp.lt.s32.totalorder %s33, 3
      %p445 = pnand %p443, %p444
      %p446 = pneg %p445
      // Predicated region
      $region53: #{tpu_custom_call.1} parent=5 // pred_check
        _
      $region54: #{tpu_custom_call.1} parent=5 // pred_check_branch
        %448 = sbr.rel (%p445) target = $region56
      $region55: #{tpu_custom_call.1} parent=5 // pred_region
        %s449 = ssub.s32 %s33, 1
        %s450 = sand.u32 %s46, 1
        %s451 = scalar_lea.sflag [#allocation5], %s450
        %s452 = sand.u32 %s46, 1
        %s453 = smul.addr %s452, 8
        %s454 = scalar_lea.vmem [#allocation4], %s453
        // Predicated region
        $region57: #{tpu_custom_call.1} parent=55 // pred_check
          %p455 = pneg %p59
        $region58: #{tpu_custom_call.1} parent=55 // pred_check_branch
          %457 = sbr.rel (%p455) target = $region60
        $region59: #{tpu_custom_call.1} parent=55 // pred_region
          %459 = dma.done %s451, 128
        $region60: #{tpu_custom_call.1} parent=55 // pred_fallthru
          _
        %s460 = sand.u32 %s38, 1
        %s461 = scalar_lea.sflag [#allocation8], %s460
        %s462 = sand.u32 %s72, 1
        %s463 = smul.addr %s462, 8
        %s464 = scalar_lea.vmem [#allocation7], %s463
        // Predicated region
        $region61: #{tpu_custom_call.1} parent=55 // pred_check
          %p465 = pneg %p85
        $region62: #{tpu_custom_call.1} parent=55 // pred_check_branch
          %467 = sbr.rel (%p465) target = $region64
        $region63: #{tpu_custom_call.1} parent=55 // pred_region
          %469 = dma.done %s461, 128
        $region64: #{tpu_custom_call.1} parent=55 // pred_fallthru
          _
        %s470 = sand.u32 %s38, 1
        %s471 = scalar_lea.sflag [#allocation8], %s470
        %s472 = sand.u32 %s98, 1
        %s473 = smul.addr %s472, 128
        %s474 = scalar_lea.vmem [#allocation9], %s473
        // Predicated region
        $region65: #{tpu_custom_call.1} parent=55 // pred_check
          %p475 = pneg %p111
        $region66: #{tpu_custom_call.1} parent=55 // pred_check_branch
          %477 = sbr.rel (%p475) target = $region68
        $region67: #{tpu_custom_call.1} parent=55 // pred_region
          %479 = dma.done %s471, 2048
        $region68: #{tpu_custom_call.1} parent=55 // pred_fallthru
          _
        // Predicated region
        $region69: #{tpu_custom_call.1} parent=55 // pred_check
          %p480 = pneg %p139
        $region70: #{tpu_custom_call.1} parent=55 // pred_check_branch
          %482 = sbr.rel (%p480) target = $region72
        $region71: #{tpu_custom_call.1} parent=55 // pred_region
          %484 = dma.done [#allocation11], 512
        $region72: #{tpu_custom_call.1} parent=55 // pred_fallthru
          _
        // Predicated region
        $region73: #{tpu_custom_call.1} parent=55 // pred_check
          %p485 = pneg %p188
        $region74: #{tpu_custom_call.1} parent=55 // pred_check_branch
          %487 = sbr.rel (%p485) target = $region76
        $region75: #{tpu_custom_call.1} parent=55 // pred_region
          %489 = dma.done [#allocation11], 512
        $region76: #{tpu_custom_call.1} parent=55 // pred_fallthru
          _
        // Predicated region
        $region77: #{tpu_custom_call.1} parent=55 // pred_check
          %p490 = pneg %p209
        $region78: #{tpu_custom_call.1} parent=55 // pred_check_branch
          %492 = sbr.rel (%p490) target = $region80
        $region79: #{tpu_custom_call.1} parent=55 // pred_region
          %494 = dma.done [#allocation14], 512
        $region80: #{tpu_custom_call.1} parent=55 // pred_fallthru
          _
        %s495 = sand.u32 %s46, 1
        %s496 = scalar_lea.sflag [#allocation5], %s495
        %s497 = sand.u32 %s46, 1
        %s498 = smul.addr %s497, 8
        %s499 = scalar_lea.vmem [#allocation4], %s498
        %p500 = pneg %p59
        %p501 = pneg %p56
        %s502 = sand.u32 %s38, 1
        %s503 = scalar_lea.sflag [#allocation8], %s502
        %s504 = sand.u32 %s72, 1
        %s505 = smul.addr %s504, 8
        %s506 = scalar_lea.vmem [#allocation7], %s505
        %p507 = pneg %p85
        %p508 = pneg %p82
        %s509 = sand.u32 %s38, 1
        %s510 = scalar_lea.sflag [#allocation8], %s509
        %s511 = sand.u32 %s98, 1
        %s512 = smul.addr %s511, 128
        %s513 = scalar_lea.vmem [#allocation9], %s512
        %p514 = pneg %p111
        %p515 = pneg %p108
        %p516 = pneg %p139
        %p517 = pneg %p136
        %s518 = sld [smem:[#allocation3]]
        %p519 = scmp.lt.s32.totalorder %s518, 3
        %s520 = scalar_select %p519, %s518, 3
        %s521 = scalar_lea.vmem %s5, %s520
        %p522 = pneg %p167
        %p523 = pneg %p164
        %p524 = pneg %p188
        %p525 = pneg %p185
        %p526 = pneg %p209
        %p527 = pneg %p206
        %p528 = pneg %p230
        %p529 = pneg %p227
        %p530 = pneg %p251
        %p531 = pneg %p248
        %p532 = pneg %p277
        %p533 = pneg %p274
        %s534 = sand.u32 %s264, 1
        %s535 = scalar_lea.sflag [#allocation6], %s534
        %s536 = sand.u32 %s264, 1
        %s537 = smul.addr %s536, 8
        %s538 = scalar_lea.vmem [#allocation15], %s537
        %p539 = pneg %p303
        %p540 = pneg %p300
        %s541 = sand.u32 %s290, 1
        %s542 = scalar_lea.sflag [#allocation17], %s541
        %s543 = sand.u32 %s290, 1
        %s544 = smul.addr %s543, 8
        %s545 = scalar_lea.vmem [#allocation16], %s544
        %s546 = smul.u32 8, %s38
        %s547 = sld [smem:[#allocation3]]
        %s548 = sld [smem:[#allocation3]]
        %p549 = scmp.lt.s32.totalorder %s548, 3
        %s550 = scalar_select %p549, %s548, 3
        %s551 = scalar_lea.vmem %s5, %s550
        %s552 = sld [smem:[#allocation3]]
        %v553 = vld [vmem:[%s474] sm:$0xff]
        %v554 = vld [vmem:[%s474 + $0x8] sm:$0xff]
        %v555 = vld [vmem:[%s474 + $0x10] sm:$0xff]
        %v556 = vld [vmem:[%s474 + $0x18] sm:$0xff]
        %v557 = vld [vmem:[%s474 + $0x20] sm:$0xff]
        %v558 = vld [vmem:[%s474 + $0x28] sm:$0xff]
        %v559 = vld [vmem:[%s474 + $0x30] sm:$0xff]
        %v560 = vld [vmem:[%s474 + $0x38] sm:$0xff]
        %v561 = vld [vmem:[%s474 + $0x40] sm:$0xff]
        %v562 = vld [vmem:[%s474 + $0x48] sm:$0xff]
        %v563 = vld [vmem:[%s474 + $0x50] sm:$0xff]
        %v564 = vld [vmem:[%s474 + $0x58] sm:$0xff]
        %v565 = vld [vmem:[%s474 + $0x60] sm:$0xff]
        %v566 = vld [vmem:[%s474 + $0x68] sm:$0xff]
        %v567 = vld [vmem:[%s474 + $0x70] sm:$0xff]
        %v568 = vld [vmem:[%s474 + $0x78] sm:$0xff]
        %v569 = vld [vmem:[%s454] sm:$0xff]
        %v570 = vld [vmem:[%s464] sm:$0xff]
        %v571 = vld [vmem:[#allocation10] sm:$0xff]
        %v572 = vld [vmem:[#allocation10 + $0x8] sm:$0xff]
        %v573 = vld [vmem:[#allocation10 + $0x10] sm:$0xff]
        %v574 = vld [vmem:[#allocation10 + $0x18] sm:$0xff]
        %v575 = vld [vmem:[%s551] sm:$0x1]
        %v577 = vperm.slane %v575, 0
        %vm579 = vcmask 261120
        %v581 = vsel %vm579, %v569, 0
        %583 = vmatpush.msra.mxu0 0.0
        %584 = vmatpush.msra.mxu0 0.0
        %585 = vmatpush.msra.mxu0 0.0
        %586 = vmatpush.msra.mxu0 0.0
        %587 = vmatpush.msra.mxu0 0.0
        %588 = vmatpush.msra.mxu0 0.0
        %589 = vmatpush.msra.mxu0 0.0
        %590 = vmatpush.msra.mxu0 0.0
        %591 = vmatpush.msra.mxu0 0.0
        %592 = vmatpush.msra.mxu0 0.0
        %593 = vmatpush.msra.mxu0 0.0
        %594 = vmatpush.msra.mxu0 0.0
        %595 = vmatpush.msra.mxu0 %v574
        %596 = vmatpush.msra.mxu0 %v573
        %597 = vmatpush.msra.mxu0 %v572
        %598 = vmatpush.msra.mxu0 %v571
        %599 = vmatmul.f32.gmra.mxu0 %v581
        %v600 = vpop.f32.mrf.mxu0
        %v601 = vadd.f32 %v577, %v600
        %602 = vdwg.mxu0
        %v603 = vld [vmem:[#allocation12] sm:$0xff]
        %v604 = vld [vmem:[#allocation12 + $0x8] sm:$0xff]
        %v605 = vld [vmem:[#allocation12 + $0x10] sm:$0xff]
        %v606 = vld [vmem:[#allocation12 + $0x18] sm:$0xff]
        %v607 = vld [vmem:[#allocation13] sm:$0xff]
        %v608 = vld [vmem:[#allocation13 + $0x8] sm:$0xff]
        %v609 = vld [vmem:[#allocation13 + $0x10] sm:$0xff]
        %v610 = vld [vmem:[#allocation13 + $0x18] sm:$0xff]
        %v612 = vsel %vm579, %v601, 0
        %614 = vmatpush.msra.mxu0 0.0
        %615 = vmatpush.msra.mxu0 0.0
        %616 = vmatpush.msra.mxu0 0.0
        %617 = vmatpush.msra.mxu0 0.0
        %618 = vmatpush.msra.mxu0 0.0
        %619 = vmatpush.msra.mxu0 0.0
        %620 = vmatpush.msra.mxu0 0.0
        %621 = vmatpush.msra.mxu0 0.0
        %622 = vmatpush.msra.mxu0 0.0
        %623 = vmatpush.msra.mxu0 0.0
        %624 = vmatpush.msra.mxu0 0.0
        %625 = vmatpush.msra.mxu0 0.0
        %626 = vmatpush.msra.mxu0 %v610
        %627 = vmatpush.msra.mxu0 %v609
        %628 = vmatpush.msra.mxu0 %v608
        %629 = vmatpush.msra.mxu0 %v607
        %630 = vmatmul.f32.gmra.mxu0 %v612
        %v631 = vpop.f32.mrf.mxu0
        %v632 = vadd.f32 0.0, %v631
        %633 = vdwg.mxu0
        %v635 = vsel %vm579, %v570, 0
        %637 = vmatpush.msra.mxu0 0.0
        %638 = vmatpush.msra.mxu0 0.0
        %639 = vmatpush.msra.mxu0 0.0
        %640 = vmatpush.msra.mxu0 0.0
        %641 = vmatpush.msra.mxu0 0.0
        %642 = vmatpush.msra.mxu0 0.0
        %643 = vmatpush.msra.mxu0 0.0
        %644 = vmatpush.msra.mxu0 0.0
        %645 = vmatpush.msra.mxu0 0.0
        %646 = vmatpush.msra.mxu0 0.0
        %647 = vmatpush.msra.mxu0 0.0
        %648 = vmatpush.msra.mxu0 0.0
        %649 = vmatpush.msra.mxu0 %v606
        %650 = vmatpush.msra.mxu0 %v605
        %651 = vmatpush.msra.mxu0 %v604
        %652 = vmatpush.msra.mxu0 %v603
        %653 = vmatmul.f32.gmra.mxu0 %v635
        %v654 = vpop.f32.mrf.mxu0
        %v655 = vadd.f32 %v632, %v654
        %656 = vdwg.mxu0
        %v657 = vld [vmem:[%s8] sm:$0x1]
        %v659 = vperm.slane %v657, 0
        %v661 = vadd.f32 %v655, %v659
        %v662 = vld [vmem:[%s9] sm:$0x1]
        %v664 = vperm.slane %v662, 0
        %v666 = vmul.f32 %v661, %v664
        %v668 = vrot.slane %v666, 1
        %v669 = vrot.slane %v666, 2
        %v670 = vrot.slane %v666, 3
        %v671 = vrot.slane %v666, 4
        %v672 = vrot.slane %v666, 5
        %v673 = vrot.slane %v666, 6
        %v674 = vrot.slane %v666, 7
        %v675 = vperm.slane %v666, 0
        %v676 = vperm.slane %v668, 0
        %v677 = vperm.slane %v669, 0
        %v678 = vperm.slane %v670, 0
        %v679 = vperm.slane %v671, 0
        %v680 = vperm.slane %v672, 0
        %v681 = vperm.slane %v673, 0
        %v682 = vperm.slane %v674, 0
        %v691 = vmul.f32 %v553, %v675
        %v692 = vmul.f32 %v554, %v675
        %v693 = vmul.f32 %v555, %v676
        %v694 = vmul.f32 %v556, %v676
        %v695 = vmul.f32 %v557, %v677
        %v696 = vmul.f32 %v558, %v677
        %v697 = vmul.f32 %v559, %v678
        %v698 = vmul.f32 %v560, %v678
        %v699 = vmul.f32 %v561, %v679
        %v700 = vmul.f32 %v562, %v679
        %v701 = vmul.f32 %v563, %v680
        %v702 = vmul.f32 %v564, %v680
        %v703 = vmul.f32 %v565, %v681
        %v704 = vmul.f32 %v566, %v681
        %v705 = vmul.f32 %v567, %v682
        %v706 = vmul.f32 %v568, %v682
        %v707 = vsel %vm579, %v691, 0.0
        %708 = vadd.xlane.f32.xlu0 %v707
        %v709 = vpop.xlane.xlu0 %708
        %v710 = vsel %vm579, %v692, 0.0
        %711 = vadd.xlane.f32.xlu0 %v710
        %v712 = vpop.xlane.xlu0 %711
        %v713 = vsel %vm579, %v693, 0.0
        %714 = vadd.xlane.f32.xlu0 %v713
        %v715 = vpop.xlane.xlu0 %714
        %v716 = vsel %vm579, %v694, 0.0
        %717 = vadd.xlane.f32.xlu0 %v716
        %v718 = vpop.xlane.xlu0 %717
        %v719 = vsel %vm579, %v695, 0.0
        %720 = vadd.xlane.f32.xlu0 %v719
        %v721 = vpop.xlane.xlu0 %720
        %v722 = vsel %vm579, %v696, 0.0
        %723 = vadd.xlane.f32.xlu0 %v722
        %v724 = vpop.xlane.xlu0 %723
        %v725 = vsel %vm579, %v697, 0.0
        %726 = vadd.xlane.f32.xlu0 %v725
        %v727 = vpop.xlane.xlu0 %726
        %v728 = vsel %vm579, %v698, 0.0
        %729 = vadd.xlane.f32.xlu0 %v728
        %v730 = vpop.xlane.xlu0 %729
        %v731 = vsel %vm579, %v699, 0.0
        %732 = vadd.xlane.f32.xlu0 %v731
        %v733 = vpop.xlane.xlu0 %732
        %v734 = vsel %vm579, %v700, 0.0
        %735 = vadd.xlane.f32.xlu0 %v734
        %v736 = vpop.xlane.xlu0 %735
        %v737 = vsel %vm579, %v701, 0.0
        %738 = vadd.xlane.f32.xlu0 %v737
        %v739 = vpop.xlane.xlu0 %738
        %v740 = vsel %vm579, %v702, 0.0
        %741 = vadd.xlane.f32.xlu0 %v740
        %v742 = vpop.xlane.xlu0 %741
        %v743 = vsel %vm579, %v703, 0.0
        %744 = vadd.xlane.f32.xlu0 %v743
        %v745 = vpop.xlane.xlu0 %744
        %v746 = vsel %vm579, %v704, 0.0
        %747 = vadd.xlane.f32.xlu0 %v746
        %v748 = vpop.xlane.xlu0 %747
        %v749 = vsel %vm579, %v705, 0.0
        %750 = vadd.xlane.f32.xlu0 %v749
        %v751 = vpop.xlane.xlu0 %750
        %v752 = vsel %vm579, %v706, 0.0
        %753 = vadd.xlane.f32.xlu0 %v752
        %v754 = vpop.xlane.xlu0 %753
        %v771 = vlaneseq
        %v772 = vand.u32 %v771, 127
        %v773 = vperm.slane %v709, %v772
        %v774 = vadd.s32 %v772, 4294967288
        %v775 = vperm.slane %v712, %v774
        %vm776 = vcmask 130112
        %v777 = vsel %vm776, %v775, %v773
        %v778 = vperm.slane %v715, %v772
        %v779 = vperm.slane %v718, %v774
        %v780 = vsel %vm776, %v779, %v778
        %v781 = vperm.slane %v721, %v772
        %v782 = vperm.slane %v724, %v774
        %v783 = vsel %vm776, %v782, %v781
        %v784 = vperm.slane %v727, %v772
        %v785 = vperm.slane %v730, %v774
        %v786 = vsel %vm776, %v785, %v784
        %v787 = vperm.slane %v733, %v772
        %v788 = vperm.slane %v736, %v774
        %v789 = vsel %vm776, %v788, %v787
        %v790 = vperm.slane %v739, %v772
        %v791 = vperm.slane %v742, %v774
        %v792 = vsel %vm776, %v791, %v790
        %v793 = vperm.slane %v745, %v772
        %v794 = vperm.slane %v748, %v774
        %v795 = vsel %vm776, %v794, %v793
        %v796 = vperm.slane %v751, %v772
        %v797 = vperm.slane %v754, %v774
        %v798 = vsel %vm776, %v797, %v796
        %vm799 = vcmask 1041409
        %v800 = vsel %vm799, %v780, %v777
        %vm801 = vcmask 1042434
        %v802 = vsel %vm801, %v783, %v800
        %vm803 = vcmask 1043459
        %v804 = vsel %vm803, %v786, %v802
        %vm805 = vcmask 1044484
        %v806 = vsel %vm805, %v789, %v804
        %vm807 = vcmask 1045509
        %v808 = vsel %vm807, %v792, %v806
        %vm809 = vcmask 1046534
        %v810 = vsel %vm809, %v795, %v808
        %vm811 = vcmask 1047559
        %v812 = vsel %vm811, %v798, %v810
        %vm814 = vcmask 130048
        %v815 = vsel %vm814, %v812, -inf
        %816 = vmax.xlane.f32.xlu0 %v815
        %v817 = vpop.xlane.xlu0 %816
        %v819 = vperm.slane %v817, 0
        %v820 = vperm.slane %v817, 1
        %v821 = vperm.slane %v817, 2
        %v822 = vperm.slane %v817, 3
        %v823 = vperm.slane %v817, 4
        %v824 = vperm.slane %v817, 5
        %v825 = vperm.slane %v817, 6
        %v826 = vperm.slane %v817, 7
        %v835 = vsub.f32 %v709, %v819
        %v836 = vsub.f32 %v712, %v819
        %v837 = vsub.f32 %v715, %v820
        %v838 = vsub.f32 %v718, %v820
        %v839 = vsub.f32 %v721, %v821
        %v840 = vsub.f32 %v724, %v821
        %v841 = vsub.f32 %v727, %v822
        %v842 = vsub.f32 %v730, %v822
        %v843 = vsub.f32 %v733, %v823
        %v844 = vsub.f32 %v736, %v823
        %v845 = vsub.f32 %v739, %v824
        %v846 = vsub.f32 %v742, %v824
        %v847 = vsub.f32 %v745, %v825
        %v848 = vsub.f32 %v748, %v825
        %v849 = vsub.f32 %v751, %v826
        %v850 = vsub.f32 %v754, %v826
        %v851 = vmul.f32 %v835, 1.442695
        %v852 = vpow.pop %v851
        %v853 = vmul.f32 %v836, 1.442695
        %v854 = vpow.pop %v853
        %v855 = vmul.f32 %v837, 1.442695
        %v856 = vpow.pop %v855
        %v857 = vmul.f32 %v838, 1.442695
        %v858 = vpow.pop %v857
        %v859 = vmul.f32 %v839, 1.442695
        %v860 = vpow.pop %v859
        %v861 = vmul.f32 %v840, 1.442695
        %v862 = vpow.pop %v861
        %v863 = vmul.f32 %v841, 1.442695
        %v864 = vpow.pop %v863
        %v865 = vmul.f32 %v842, 1.442695
        %v866 = vpow.pop %v865
        %v867 = vmul.f32 %v843, 1.442695
        %v868 = vpow.pop %v867
        %v869 = vmul.f32 %v844, 1.442695
        %v870 = vpow.pop %v869
        %v871 = vmul.f32 %v845, 1.442695
        %v872 = vpow.pop %v871
        %v873 = vmul.f32 %v846, 1.442695
        %v874 = vpow.pop %v873
        %v875 = vmul.f32 %v847, 1.442695
        %v876 = vpow.pop %v875
        %v877 = vmul.f32 %v848, 1.442695
        %v878 = vpow.pop %v877
        %v879 = vmul.f32 %v849, 1.442695
        %v880 = vpow.pop %v879
        %v881 = vmul.f32 %v850, 1.442695
        %v882 = vpow.pop %v881
        %899 = vset.pattern.permute.xlu0 0
        %900 = vperm.xlu0 %899, %v852
        %v901 = vpop.permute.xlu0 %900
        %902 = vset.pattern.permute.xlu0 0
        %903 = vperm.xlu0 %902, %v854
        %v904 = vpop.permute.xlu0 %903
        %905 = vset.pattern.permute.xlu0 0
        %906 = vperm.xlu0 %905, %v856
        %v907 = vpop.permute.xlu0 %906
        %908 = vset.pattern.permute.xlu0 0
        %909 = vperm.xlu0 %908, %v858
        %v910 = vpop.permute.xlu0 %909
        %911 = vset.pattern.permute.xlu0 0
        %912 = vperm.xlu0 %911, %v860
        %v913 = vpop.permute.xlu0 %912
        %914 = vset.pattern.permute.xlu0 0
        %915 = vperm.xlu0 %914, %v862
        %v916 = vpop.permute.xlu0 %915
        %917 = vset.pattern.permute.xlu0 0
        %918 = vperm.xlu0 %917, %v864
        %v919 = vpop.permute.xlu0 %918
        %920 = vset.pattern.permute.xlu0 0
        %921 = vperm.xlu0 %920, %v866
        %v922 = vpop.permute.xlu0 %921
        %923 = vset.pattern.permute.xlu0 0
        %924 = vperm.xlu0 %923, %v868
        %v925 = vpop.permute.xlu0 %924
        %926 = vset.pattern.permute.xlu0 0
        %927 = vperm.xlu0 %926, %v870
        %v928 = vpop.permute.xlu0 %927
        %929 = vset.pattern.permute.xlu0 0
        %930 = vperm.xlu0 %929, %v872
        %v931 = vpop.permute.xlu0 %930
        %932 = vset.pattern.permute.xlu0 0
        %933 = vperm.xlu0 %932, %v874
        %v934 = vpop.permute.xlu0 %933
        %935 = vset.pattern.permute.xlu0 0
        %936 = vperm.xlu0 %935, %v876
        %v937 = vpop.permute.xlu0 %936
        %938 = vset.pattern.permute.xlu0 0
        %939 = vperm.xlu0 %938, %v878
        %v940 = vpop.permute.xlu0 %939
        %941 = vset.pattern.permute.xlu0 0
        %942 = vperm.xlu0 %941, %v880
        %v943 = vpop.permute.xlu0 %942
        %944 = vset.pattern.permute.xlu0 0
        %945 = vperm.xlu0 %944, %v882
        %v946 = vpop.permute.xlu0 %945
        %v947 = vperm.slane %v901, %v772
        %v948 = vperm.slane %v904, %v774
        %v949 = vsel %vm776, %v948, %v947
        %v950 = vperm.slane %v907, %v772
        %v951 = vperm.slane %v910, %v774
        %v952 = vsel %vm776, %v951, %v950
        %v953 = vperm.slane %v913, %v772
        %v954 = vperm.slane %v916, %v774
        %v955 = vsel %vm776, %v954, %v953
        %v956 = vperm.slane %v919, %v772
        %v957 = vperm.slane %v922, %v774
        %v958 = vsel %vm776, %v957, %v956
        %v959 = vperm.slane %v925, %v772
        %v960 = vperm.slane %v928, %v774
        %v961 = vsel %vm776, %v960, %v959
        %v962 = vperm.slane %v931, %v772
        %v963 = vperm.slane %v934, %v774
        %v964 = vsel %vm776, %v963, %v962
        %v965 = vperm.slane %v937, %v772
        %v966 = vperm.slane %v940, %v774
        %v967 = vsel %vm776, %v966, %v965
        %v968 = vperm.slane %v943, %v772
        %v969 = vperm.slane %v946, %v774
        %v970 = vsel %vm776, %v969, %v968
        %v971 = vsel %vm799, %v952, %v949
        %v972 = vsel %vm801, %v955, %v971
        %v973 = vsel %vm803, %v958, %v972
        %v974 = vsel %vm805, %v961, %v973
        %v975 = vsel %vm807, %v964, %v974
        %v976 = vsel %vm809, %v967, %v975
        %v977 = vsel %vm811, %v970, %v976
        %v979 = vsel %vm814, %v977, 0.0
        %980 = vadd.xlane.f32.xlu0 %v979
        %v981 = vpop.xlane.xlu0 %980
        %v982 = vrcp.pop %v981
        %v984 = vperm.slane %v982, 0
        %v985 = vperm.slane %v982, 1
        %v986 = vperm.slane %v982, 2
        %v987 = vperm.slane %v982, 3
        %v988 = vperm.slane %v982, 4
        %v989 = vperm.slane %v982, 5
        %v990 = vperm.slane %v982, 6
        %v991 = vperm.slane %v982, 7
        %v1000 = vmul.f32 %v852, %v984
        %v1001 = vmul.f32 %v854, %v984
        %v1002 = vmul.f32 %v856, %v985
        %v1003 = vmul.f32 %v858, %v985
        %v1004 = vmul.f32 %v860, %v986
        %v1005 = vmul.f32 %v862, %v986
        %v1006 = vmul.f32 %v864, %v987
        %v1007 = vmul.f32 %v866, %v987
        %v1008 = vmul.f32 %v868, %v988
        %v1009 = vmul.f32 %v870, %v988
        %v1010 = vmul.f32 %v872, %v989
        %v1011 = vmul.f32 %v874, %v989
        %v1012 = vmul.f32 %v876, %v990
        %v1013 = vmul.f32 %v878, %v990
        %v1014 = vmul.f32 %v880, %v991
        %v1015 = vmul.f32 %v882, %v991
        %1032 = vset.pattern.permute.xlu0 0
        %1033 = vperm.xlu0 %1032, %v1000
        %v1034 = vpop.permute.xlu0 %1033
        %1035 = vset.pattern.permute.xlu0 0
        %1036 = vperm.xlu0 %1035, %v1001
        %v1037 = vpop.permute.xlu0 %1036
        %1038 = vset.pattern.permute.xlu0 0
        %1039 = vperm.xlu0 %1038, %v1002
        %v1040 = vpop.permute.xlu0 %1039
        %1041 = vset.pattern.permute.xlu0 0
        %1042 = vperm.xlu0 %1041, %v1003
        %v1043 = vpop.permute.xlu0 %1042
        %1044 = vset.pattern.permute.xlu0 0
        %1045 = vperm.xlu0 %1044, %v1004
        %v1046 = vpop.permute.xlu0 %1045
        %1047 = vset.pattern.permute.xlu0 0
        %1048 = vperm.xlu0 %1047, %v1005
        %v1049 = vpop.permute.xlu0 %1048
        %1050 = vset.pattern.permute.xlu0 0
        %1051 = vperm.xlu0 %1050, %v1006
        %v1052 = vpop.permute.xlu0 %1051
        %1053 = vset.pattern.permute.xlu0 0
        %1054 = vperm.xlu0 %1053, %v1007
        %v1055 = vpop.permute.xlu0 %1054
        %1056 = vset.pattern.permute.xlu0 0
        %1057 = vperm.xlu0 %1056, %v1008
        %v1058 = vpop.permute.xlu0 %1057
        %1059 = vset.pattern.permute.xlu0 0
        %1060 = vperm.xlu0 %1059, %v1009
        %v1061 = vpop.permute.xlu0 %1060
        %1062 = vset.pattern.permute.xlu0 0
        %1063 = vperm.xlu0 %1062, %v1010
        %v1064 = vpop.permute.xlu0 %1063
        %1065 = vset.pattern.permute.xlu0 0
        %1066 = vperm.xlu0 %1065, %v1011
        %v1067 = vpop.permute.xlu0 %1066
        %1068 = vset.pattern.permute.xlu0 0
        %1069 = vperm.xlu0 %1068, %v1012
        %v1070 = vpop.permute.xlu0 %1069
        %1071 = vset.pattern.permute.xlu0 0
        %1072 = vperm.xlu0 %1071, %v1013
        %v1073 = vpop.permute.xlu0 %1072
        %1074 = vset.pattern.permute.xlu0 0
        %1075 = vperm.xlu0 %1074, %v1014
        %v1076 = vpop.permute.xlu0 %1075
        %1077 = vset.pattern.permute.xlu0 0
        %1078 = vperm.xlu0 %1077, %v1015
        %v1079 = vpop.permute.xlu0 %1078
        %v1080 = vperm.slane %v1034, %v772
        %v1081 = vperm.slane %v1037, %v774
        %v1082 = vsel %vm776, %v1081, %v1080
        %v1083 = vperm.slane %v1040, %v772
        %v1084 = vperm.slane %v1043, %v774
        %v1085 = vsel %vm776, %v1084, %v1083
        %v1086 = vperm.slane %v1046, %v772
        %v1087 = vperm.slane %v1049, %v774
        %v1088 = vsel %vm776, %v1087, %v1086
        %v1089 = vperm.slane %v1052, %v772
        %v1090 = vperm.slane %v1055, %v774
        %v1091 = vsel %vm776, %v1090, %v1089
        %v1092 = vperm.slane %v1058, %v772
        %v1093 = vperm.slane %v1061, %v774
        %v1094 = vsel %vm776, %v1093, %v1092
        %v1095 = vperm.slane %v1064, %v772
        %v1096 = vperm.slane %v1067, %v774
        %v1097 = vsel %vm776, %v1096, %v1095
        %v1098 = vperm.slane %v1070, %v772
        %v1099 = vperm.slane %v1073, %v774
        %v1100 = vsel %vm776, %v1099, %v1098
        %v1101 = vperm.slane %v1076, %v772
        %v1102 = vperm.slane %v1079, %v774
        %v1103 = vsel %vm776, %v1102, %v1101
        %v1104 = vsel %vm799, %v1085, %v1082
        %v1105 = vsel %vm801, %v1088, %v1104
        %v1106 = vsel %vm803, %v1091, %v1105
        %v1107 = vsel %vm805, %v1094, %v1106
        %v1108 = vsel %vm807, %v1097, %v1107
        %v1109 = vsel %vm809, %v1100, %v1108
        %v1110 = vsel %vm811, %v1103, %v1109
        %1112 = vst.msk [vmem:[%s545] sm:$0xff] %vm814, %v1110
        %v1113 = vsel %vm814, %v1082, 0
        %1115 = vmatpush.msra.mxu0 0.0
        %1116 = vmatpush.msra.mxu0 0.0
        %1117 = vmatpush.msra.mxu0 0.0
        %1118 = vmatpush.msra.mxu0 0.0
        %1119 = vmatpush.msra.mxu0 0.0
        %1120 = vmatpush.msra.mxu0 0.0
        %1121 = vmatpush.msra.mxu0 0.0
        %1122 = vmatpush.msra.mxu0 0.0
        %1123 = vmatpush.msra.mxu0 0.0
        %1124 = vmatpush.msra.mxu0 0.0
        %1125 = vmatpush.msra.mxu0 0.0
        %1126 = vmatpush.msra.mxu0 0.0
        %1127 = vmatpush.msra.mxu0 0.0
        %1128 = vmatpush.msra.mxu0 0.0
        %1129 = vmatpush.msra.mxu0 %v554
        %1130 = vmatpush.msra.mxu0 %v553
        %1131 = vmatmul.f32.gmra.mxu0 %v1113
        %v1132 = vpop.f32.mrf.mxu0
        %v1133 = vadd.f32 0.0, %v1132
        %1134 = vdwg.mxu0
        %v1135 = vsel %vm814, %v1085, 0
        %1137 = vmatpush.msra.mxu0 0.0
        %1138 = vmatpush.msra.mxu0 0.0
        %1139 = vmatpush.msra.mxu0 0.0
        %1140 = vmatpush.msra.mxu0 0.0
        %1141 = vmatpush.msra.mxu0 0.0
        %1142 = vmatpush.msra.mxu0 0.0
        %1143 = vmatpush.msra.mxu0 0.0
        %1144 = vmatpush.msra.mxu0 0.0
        %1145 = vmatpush.msra.mxu0 0.0
        %1146 = vmatpush.msra.mxu0 0.0
        %1147 = vmatpush.msra.mxu0 0.0
        %1148 = vmatpush.msra.mxu0 0.0
        %1149 = vmatpush.msra.mxu0 0.0
        %1150 = vmatpush.msra.mxu0 0.0
        %1151 = vmatpush.msra.mxu0 %v556
        %1152 = vmatpush.msra.mxu0 %v555
        %1153 = vmatmul.f32.gmra.mxu0 %v1135
        %v1154 = vpop.f32.mrf.mxu0
        %v1155 = vadd.f32 0.0, %v1154
        %1156 = vdwg.mxu0
        %v1157 = vsel %vm814, %v1088, 0
        %1159 = vmatpush.msra.mxu0 0.0
        %1160 = vmatpush.msra.mxu0 0.0
        %1161 = vmatpush.msra.mxu0 0.0
        %1162 = vmatpush.msra.mxu0 0.0
        %1163 = vmatpush.msra.mxu0 0.0
        %1164 = vmatpush.msra.mxu0 0.0
        %1165 = vmatpush.msra.mxu0 0.0
        %1166 = vmatpush.msra.mxu0 0.0
        %1167 = vmatpush.msra.mxu0 0.0
        %1168 = vmatpush.msra.mxu0 0.0
        %1169 = vmatpush.msra.mxu0 0.0
        %1170 = vmatpush.msra.mxu0 0.0
        %1171 = vmatpush.msra.mxu0 0.0
        %1172 = vmatpush.msra.mxu0 0.0
        %1173 = vmatpush.msra.mxu0 %v558
        %1174 = vmatpush.msra.mxu0 %v557
        %1175 = vmatmul.f32.gmra.mxu0 %v1157
        %v1176 = vpop.f32.mrf.mxu0
        %v1177 = vadd.f32 0.0, %v1176
        %1178 = vdwg.mxu0
        %v1179 = vsel %vm814, %v1091, 0
        %1181 = vmatpush.msra.mxu0 0.0
        %1182 = vmatpush.msra.mxu0 0.0
        %1183 = vmatpush.msra.mxu0 0.0
        %1184 = vmatpush.msra.mxu0 0.0
        %1185 = vmatpush.msra.mxu0 0.0
        %1186 = vmatpush.msra.mxu0 0.0
        %1187 = vmatpush.msra.mxu0 0.0
        %1188 = vmatpush.msra.mxu0 0.0
        %1189 = vmatpush.msra.mxu0 0.0
        %1190 = vmatpush.msra.mxu0 0.0
        %1191 = vmatpush.msra.mxu0 0.0
        %1192 = vmatpush.msra.mxu0 0.0
        %1193 = vmatpush.msra.mxu0 0.0
        %1194 = vmatpush.msra.mxu0 0.0
        %1195 = vmatpush.msra.mxu0 %v560
        %1196 = vmatpush.msra.mxu0 %v559
        %1197 = vmatmul.f32.gmra.mxu0 %v1179
        %v1198 = vpop.f32.mrf.mxu0
        %v1199 = vadd.f32 0.0, %v1198
        %1200 = vdwg.mxu0
        %v1201 = vsel %vm814, %v1094, 0
        %1203 = vmatpush.msra.mxu0 0.0
        %1204 = vmatpush.msra.mxu0 0.0
        %1205 = vmatpush.msra.mxu0 0.0
        %1206 = vmatpush.msra.mxu0 0.0
        %1207 = vmatpush.msra.mxu0 0.0
        %1208 = vmatpush.msra.mxu0 0.0
        %1209 = vmatpush.msra.mxu0 0.0
        %1210 = vmatpush.msra.mxu0 0.0
        %1211 = vmatpush.msra.mxu0 0.0
        %1212 = vmatpush.msra.mxu0 0.0
        %1213 = vmatpush.msra.mxu0 0.0
        %1214 = vmatpush.msra.mxu0 0.0
        %1215 = vmatpush.msra.mxu0 0.0
        %1216 = vmatpush.msra.mxu0 0.0
        %1217 = vmatpush.msra.mxu0 %v562
        %1218 = vmatpush.msra.mxu0 %v561
        %1219 = vmatmul.f32.gmra.mxu0 %v1201
        %v1220 = vpop.f32.mrf.mxu0
        %v1221 = vadd.f32 0.0, %v1220
        %1222 = vdwg.mxu0
        %v1223 = vsel %vm814, %v1097, 0
        %1225 = vmatpush.msra.mxu0 0.0
        %1226 = vmatpush.msra.mxu0 0.0
        %1227 = vmatpush.msra.mxu0 0.0
        %1228 = vmatpush.msra.mxu0 0.0
        %1229 = vmatpush.msra.mxu0 0.0
        %1230 = vmatpush.msra.mxu0 0.0
        %1231 = vmatpush.msra.mxu0 0.0
        %1232 = vmatpush.msra.mxu0 0.0
        %1233 = vmatpush.msra.mxu0 0.0
        %1234 = vmatpush.msra.mxu0 0.0
        %1235 = vmatpush.msra.mxu0 0.0
        %1236 = vmatpush.msra.mxu0 0.0
        %1237 = vmatpush.msra.mxu0 0.0
        %1238 = vmatpush.msra.mxu0 0.0
        %1239 = vmatpush.msra.mxu0 %v564
        %1240 = vmatpush.msra.mxu0 %v563
        %1241 = vmatmul.f32.gmra.mxu0 %v1223
        %v1242 = vpop.f32.mrf.mxu0
        %v1243 = vadd.f32 0.0, %v1242
        %1244 = vdwg.mxu0
        %v1245 = vsel %vm814, %v1100, 0
        %1247 = vmatpush.msra.mxu0 0.0
        %1248 = vmatpush.msra.mxu0 0.0
        %1249 = vmatpush.msra.mxu0 0.0
        %1250 = vmatpush.msra.mxu0 0.0
        %1251 = vmatpush.msra.mxu0 0.0
        %1252 = vmatpush.msra.mxu0 0.0
        %1253 = vmatpush.msra.mxu0 0.0
        %1254 = vmatpush.msra.mxu0 0.0
        %1255 = vmatpush.msra.mxu0 0.0
        %1256 = vmatpush.msra.mxu0 0.0
        %1257 = vmatpush.msra.mxu0 0.0
        %1258 = vmatpush.msra.mxu0 0.0
        %1259 = vmatpush.msra.mxu0 0.0
        %1260 = vmatpush.msra.mxu0 0.0
        %1261 = vmatpush.msra.mxu0 %v566
        %1262 = vmatpush.msra.mxu0 %v565
        %1263 = vmatmul.f32.gmra.mxu0 %v1245
        %v1264 = vpop.f32.mrf.mxu0
        %v1265 = vadd.f32 0.0, %v1264
        %1266 = vdwg.mxu0
        %v1267 = vsel %vm814, %v1103, 0
        %1269 = vmatpush.msra.mxu0 0.0
        %1270 = vmatpush.msra.mxu0 0.0
        %1271 = vmatpush.msra.mxu0 0.0
        %1272 = vmatpush.msra.mxu0 0.0
        %1273 = vmatpush.msra.mxu0 0.0
        %1274 = vmatpush.msra.mxu0 0.0
        %1275 = vmatpush.msra.mxu0 0.0
        %1276 = vmatpush.msra.mxu0 0.0
        %1277 = vmatpush.msra.mxu0 0.0
        %1278 = vmatpush.msra.mxu0 0.0
        %1279 = vmatpush.msra.mxu0 0.0
        %1280 = vmatpush.msra.mxu0 0.0
        %1281 = vmatpush.msra.mxu0 0.0
        %1282 = vmatpush.msra.mxu0 0.0
        %1283 = vmatpush.msra.mxu0 %v568
        %1284 = vmatpush.msra.mxu0 %v567
        %1285 = vmatmul.f32.gmra.mxu0 %v1267
        %v1286 = vpop.f32.mrf.mxu0
        %v1287 = vadd.f32 0.0, %v1286
        %1288 = vdwg.mxu0
        %v1297 = vrot.slane %v1155, 7
        %v1298 = vsel %vm799, %v1297, %v1133
        %v1299 = vrot.slane %v1177, 6
        %v1300 = vsel %vm801, %v1299, %v1298
        %v1301 = vrot.slane %v1199, 5
        %v1302 = vsel %vm803, %v1301, %v1300
        %v1303 = vrot.slane %v1221, 4
        %v1304 = vsel %vm805, %v1303, %v1302
        %v1305 = vrot.slane %v1243, 3
        %v1306 = vsel %vm807, %v1305, %v1304
        %v1307 = vrot.slane %v1265, 2
        %v1308 = vsel %vm809, %v1307, %v1306
        %v1309 = vrot.slane %v1287, 1
        %v1310 = vsel %vm811, %v1309, %v1308
        %1312 = vst.msk [vmem:[%s538] sm:$0xff] %vm579, %v1310
        %s1313 = sand.u32 %s264, 1
        %s1314 = scalar_lea.sflag [#allocation6], %s1313
        %s1315 = sand.u32 %s264, 1
        %s1316 = smul.addr %s1315, 8
        %s1317 = scalar_lea.vmem [#allocation15], %s1316
        %s1318 = sand.u32 %s290, 1
        %s1319 = scalar_lea.sflag [#allocation17], %s1318
        %s1320 = sand.u32 %s290, 1
        %s1321 = smul.addr %s1320, 8
        %s1322 = scalar_lea.vmem [#allocation16], %s1321
        // Predicated region
        $region81: #{tpu_custom_call.1} parent=55 // pred_check
          %p1323 = pneg %p274
        $region82: #{tpu_custom_call.1} parent=55 // pred_check_branch
          %1325 = sbr.rel (%p1323) target = $region84
        $region83: #{tpu_custom_call.1} parent=55 // pred_region
          %1327 = vsyncadd %s1314, 0
          %s1328 = smul.addr %s38, 8
          %s1329 = scalar_lea.hbm %s10, %s1328
          %s1331 = sshll.u32 %s1317, 4
          %s1332 = int_to_ptr.vmem [resolvable:$true] %s1331
          %s1333 = sshll.u32 %s1329, 4
          %s1334 = int_to_ptr.hbm [resolvable:$true] %s1333
          %1336 = dma.vmem_to_hbm [thread:$0]  %s1332, 128, %s1334, %s1314
        $region84: #{tpu_custom_call.1} parent=55 // pred_fallthru
          _
        // Predicated region
        $region85: #{tpu_custom_call.1} parent=55 // pred_check
          %p1337 = pneg %p300
        $region86: #{tpu_custom_call.1} parent=55 // pred_check_branch
          %1339 = sbr.rel (%p1337) target = $region88
        $region87: #{tpu_custom_call.1} parent=55 // pred_region
          %1341 = vsyncadd %s1319, 0
          %s1342 = smul.addr %s38, 8
          %s1343 = scalar_lea.hbm %s11, %s1342
          %s1345 = sshll.u32 %s1322, 4
          %s1346 = int_to_ptr.vmem [resolvable:$true] %s1345
          %s1347 = sshll.u32 %s1343, 4
          %s1348 = int_to_ptr.hbm [resolvable:$true] %s1347
          %1350 = dma.vmem_to_hbm [thread:$0]  %s1346, 128, %s1348, %s1319
        $region88: #{tpu_custom_call.1} parent=55 // pred_fallthru
          _
      $region56: #{tpu_custom_call.1} parent=5 // pred_fallthru
        _
      %p1351 = scmp.le.s32.totalorder 2, %s33
      // Predicated region
      $region89: #{tpu_custom_call.1} parent=5 // pred_check
        %p1352 = pneg %p1351
      $region90: #{tpu_custom_call.1} parent=5 // pred_check_branch
        %1354 = sbr.rel (%p1352) target = $region92
      $region91: #{tpu_custom_call.1} parent=5 // pred_region
        %s1355 = ssub.s32 %s33, 2
        // Predicated region
        $region93: #{tpu_custom_call.1} parent=91 // pred_check
          %p1356 = pneg %p280
        $region94: #{tpu_custom_call.1} parent=91 // pred_check_branch
          %1358 = sbr.rel (%p1356) target = $region96
        $region95: #{tpu_custom_call.1} parent=91 // pred_region
          %s1359 = sand.u32 %s265, 1
          %s1360 = scalar_lea.sflag [#allocation6], %s1359
          %s1361 = sand.u32 %s265, 1
          %s1362 = smul.addr %s1361, 8
          %s1363 = scalar_lea.vmem [#allocation15], %s1362
          %1365 = dma.done %s1360, 128
        $region96: #{tpu_custom_call.1} parent=91 // pred_fallthru
          _
        // Predicated region
        $region97: #{tpu_custom_call.1} parent=91 // pred_check
          %p1366 = pneg %p306
        $region98: #{tpu_custom_call.1} parent=91 // pred_check_branch
          %1368 = sbr.rel (%p1366) target = $region100
        $region99: #{tpu_custom_call.1} parent=91 // pred_region
          %s1369 = sand.u32 %s291, 1
          %s1370 = scalar_lea.sflag [#allocation17], %s1369
          %s1371 = sand.u32 %s291, 1
          %s1372 = smul.addr %s1371, 8
          %s1373 = scalar_lea.vmem [#allocation16], %s1372
          %1375 = dma.done %s1370, 128
        $region100: #{tpu_custom_call.1} parent=91 // pred_fallthru
          _
      $region92: #{tpu_custom_call.1} parent=5 // pred_fallthru
        _
    $region6: #{tpu_custom_call.1} parent=1 // loop_footer
      %s37 = sadd.s32 1, %s33
    $region7: #{tpu_custom_call.1} parent=1 // loop_footer_branch
      %32 = sbr.rel target = $region3
    $region8: #{tpu_custom_call.1} parent=1 // loop_exit
      _
    %1376 = vsyncpa [#allocation5], 1
    %s1377 = scalar_lea.sflag [#allocation5], 1
    %1378 = vsyncpa %s1377, 1
    %1379 = vsyncpa [#allocation8], 1
    %s1380 = scalar_lea.sflag [#allocation8], 1
    %1381 = vsyncpa %s1380, 1
    %1382 = vsyncpa [#allocation11], 1
    %1383 = vsyncpa [#allocation14], 1
    %1384 = vsyncpa [#allocation6], 1
    %s1385 = scalar_lea.sflag [#allocation6], 1
    %1386 = vsyncpa %s1385, 1
    %1387 = vsyncpa [#allocation17], 1
    %s1388 = scalar_lea.sflag [#allocation17], 1
    %1389 = vsyncpa %s1388, 1

</llo_original>
